<compile_context>
chip_gen: v7x
topology: tpu7x:2x2x1
jax: 0.10.0
libtpu: 0.0.40
codegen_flags: <defaults>
</compile_context>

<pallas_src>
import numpy as np
import jax
import jax.numpy as jnp
from jax import lax
from jax.experimental import pallas as pl
from jax.experimental.pallas import tpu as pltpu

# ---------------- configuration (mirrors hp_dict) ----------------
B = 2                      # batch
C_IN = 4                   # hp_dict['in_channels']
H = W = 16                 # hp_dict['input_shape'] = (16, 16)
PATCH = 4                  # hp_dict['patch_sizes'] = [4]
STRIDE = 4                 # hp_dict['first_stride']
C_OUT = 32                 # hp_dict['out_channels'] = [32]
NUM_CLASSES = 10           # hp_dict['num_classes']
HP = H // STRIDE           # patches per side
P = HP * HP                # num_patches = 16
T = P * (P - 1) // 2       # size_triu = 120 (tril offset=-1)
K = C_IN * PATCH * PATCH   # im2col feature size = 64
F2 = 2 * C_OUT             # concat feature size = 64
EPS = 1e-5

# packed-slab layout: every sub-matrix starts on a 128-lane boundary.
W_SLAB_COLS = 5 * 128      # wc@0 | we*2@128 | w1@256 | w2@384 | wp@512
V_ROWS_FIXED = 8           # rows: bc, be, b1, b2, g3, beta3, wi, bp ; pos-emb rows follow
OUT_COLS = 256             # lanes [0:10] = y_hat, lanes [128:128+T] = attention


# ---------------- Pallas kernel (bb samples per grid step, stacked in rows) ---
def make_kernel(bb):
    rows = bb * P            # patch rows handled per grid step

    def kernel(patch_ref, sblk_ref, wslab_ref, vslab_ref, out_ref, pc_scr):
        f32 = jnp.float32
        bf16 = jnp.bfloat16
        x = patch_ref[...]                                           # (rows, K) bf16

        # patch conv (stride == kernel => im2col matmul) + ReLU + pos-emb
        wc = wslab_ref[:, 0:C_OUT]                                   # (K, C) bf16 @ lane 0
        bc = vslab_ref[0:1, 0:C_OUT]                                 # (1, C) f32
        pos = vslab_ref[V_ROWS_FIXED:V_ROWS_FIXED + rows, 0:C_OUT]   # (rows, C) f32
        feat = jnp.maximum(jnp.dot(x, wc, preferred_element_type=f32) + bc, 0.0)
        feat = feat + pos

        # embedding Linear + ReLU; the `x += x` doubling is folded into we/be
        we2 = wslab_ref[0:C_OUT, 128:128 + C_OUT]                    # (C, C) bf16 @ lane 128
        be2 = vslab_ref[1:2, 0:C_OUT]
        emb = jnp.maximum(
            jnp.dot(feat.astype(bf16), we2, preferred_element_type=f32) + be2, 0.0)

        # strict-lower-tri pairwise gather+concat as ONE selection matmul:
        #   pc = S_blk @ [[emb, 0], [0, emb]]
        emb_bf = emb.astype(bf16)
        zero = jnp.zeros_like(emb_bf)
        ebd = jnp.concatenate(
            [jnp.concatenate([emb_bf, zero], axis=-1),
             jnp.concatenate([zero, emb_bf], axis=-1)], axis=0)      # (2*rows, F2) bf16
        pc = jnp.dot(sblk_ref[...], ebd, preferred_element_type=f32) # (bb*T, F2) f32
        pc_scr[...] = pc                                             # VMEM home (cut live range)

        # double-mix MLP: Linear -> ReLU -> Linear (bf16 operands, f32 acc)
        w1 = wslab_ref[:, 256:256 + F2]
        b1 = vslab_ref[2:3, 0:F2]
        w2 = wslab_ref[:, 384:384 + F2]
        b2 = vslab_ref[3:4, 0:F2]
        h = jnp.maximum(jnp.dot(pc.astype(bf16), w1, preferred_element_type=f32) + b1, 0.0)
        ce = jnp.dot(h.astype(bf16), w2, preferred_element_type=f32) + b2

        # LayerNorm(F2) + residual (f32 VPU math; pc reloaded from VMEM)
        g3 = vslab_ref[4:5, 0:F2]
        bt3 = vslab_ref[5:6, 0:F2]
        mu = jnp.mean(ce, axis=-1, keepdims=True)
        var = jnp.mean((ce - mu) ** 2, axis=-1, keepdims=True)
        pc2 = (ce - mu) * lax.rsqrt(var + EPS) * g3 + bt3 + pc_scr[...]   # (bb*T, F2)

        # interaction logits on the VPU (lane reduce); lane-dense per-sample softmax (f32)
        wi_row = vslab_ref[6:7, 0:F2]                                # (1, F2)
        logits = jnp.sum((pc2 * wi_row).reshape(bb, T, F2), axis=-1) # (bb, T)
        m = jnp.max(logits, axis=-1, keepdims=True)
        e = jnp.exp(logits - m)
        attn = e / jnp.sum(e, axis=-1, keepdims=True)                # (bb, T) f32

        # pooled = block-diag(attn) @ pc  (single MXU matmul, no per-sample loop)
        attn_rep = jnp.concatenate([attn] * bb, axis=1)              # (bb, bb*T)
        col = lax.broadcasted_iota(jnp.int32, (bb, bb * T), 1)
        row = lax.broadcasted_iota(jnp.int32, (bb, bb * T), 0)
        mask = (col >= row * T) & (col < (row + 1) * T)
        attn_bd = jnp.where(mask, attn_rep, 0.0)                     # (bb, bb*T)
        pooled = jnp.dot(attn_bd.astype(bf16), pc_scr[...].astype(bf16),
                         preferred_element_type=f32)                 # (bb, F2)

        # prediction head
        wp = wslab_ref[:, 512:512 + NUM_CLASSES]                     # (F2, NC) bf16 @ lane 512
        bp = vslab_ref[7:8, 0:NUM_CLASSES]
        y = jnp.dot(pooled.astype(bf16), wp, preferred_element_type=f32) + bp   # (bb, NC)

        # single lane-dense FULL-TILE store: [y | pad] ++ [attn | pad] at the
        # 128-lane boundary (no zero-fill store, no masked partial stores).
        y_row = jnp.concatenate(
            [y, jnp.zeros((bb, 128 - NUM_CLASSES), f32)], axis=-1)   # (bb, 128)
        a_row = jnp.concatenate(
            [attn, jnp.zeros((bb, 128 - T), f32)], axis=-1)          # (bb, 128)
        out_ref[...] = jnp.concatenate([y_row, a_row], axis=-1)      # (bb, 256)

    return kernel


# ---------------- glue: im2col, selector, packing, pallas_call wrapper --------
def im2col(x):
    # (B, C_in, H, W) NCHW -> (B, P, C_in*p*p), row-major patch order matching
    # conv output .view(B, C, -1) flattening.
    xp = x.reshape(B, C_IN, HP, PATCH, HP, PATCH)
    xp = xp.transpose(0, 2, 4, 1, 3, 5)
    return xp.reshape(B, P, K)


def build_pair_selector(bb):
    """S_blk (bb*T, 2*bb*P) so that  pc = S_blk @ blockdiag(emb, emb)."""
    rows_ix, cols_ix = np.tril_indices(P, k=-1)          # offset=-1 strict lower
    S = np.zeros((bb * T, 2 * bb * P), np.float32)
    for b in range(bb):
        r = b * T + np.arange(T)
        S[r, b * P + rows_ix] = 1.0                       # picks emb row half
        S[r, bb * P + b * P + cols_ix] = 1.0              # picks emb col half
    return jnp.asarray(S)


def init_params(key):
    ks = jax.random.split(key, 12)
    s = 0.05
    f32 = jnp.float32
    return dict(
        wc=jax.random.normal(ks[0], (K, C_OUT), f32) * s,       # conv weight (im2col form)
        bc=jax.random.normal(ks[1], (1, C_OUT), f32) * s,       # conv bias
        pos=jax.random.normal(ks[2], (P, C_OUT), f32) * s,      # positional embedding
        we=jax.random.normal(ks[3], (C_OUT, C_OUT), f32) * s,   # embedding Linear
        be=jax.random.normal(ks[4], (1, C_OUT), f32) * s,
        w1=jax.random.normal(ks[5], (F2, F2), f32) * s,         # double_mix_mlp L1
        b1=jax.random.normal(ks[6], (1, F2), f32) * s,
        w2=jax.random.normal(ks[7], (F2, F2), f32) * s,         # double_mix_mlp L2
        b2=jax.random.normal(ks[8], (1, F2), f32) * s,
        g3=jnp.ones((1, F2), f32),                              # _ln3 gamma
        beta3=jnp.zeros((1, F2), f32),                          # _ln3 beta
        wi=jax.random.normal(ks[9], (F2, 1), f32) * s,          # interaction_mlp (no bias)
        wp=jax.random.normal(ks[10], (F2, NUM_CLASSES), f32) * s,   # prediction_mlp
        bp=jax.random.normal(ks[11], (1, NUM_CLASSES), f32) * s,
    )


def pack_params(params, bb):
    # weight slab (64, 640), 128-lane-aligned sub-matrices, stored as bf16
    wslab = jnp.zeros((K, W_SLAB_COLS), jnp.float32)
    wslab = wslab.at[:, 0:C_OUT].set(params["wc"])
    wslab = wslab.at[0:C_OUT, 128:128 + C_OUT].set(params["we"] * 2.0)   # fold `x += x`
    wslab = wslab.at[:, 256:256 + F2].set(params["w1"])
    wslab = wslab.at[:, 384:384 + F2].set(params["w2"])
    wslab = wslab.at[:, 512:512 + NUM_CLASSES].set(params["wp"])
    wslab = wslab.astype(jnp.bfloat16)

    # vector slab (8 + bb*P, 128) f32: one row per bias/vector + tiled pos-emb
    vslab = jnp.zeros((V_ROWS_FIXED + bb * P, 128), jnp.float32)
    vslab = vslab.at[0, 0:C_OUT].set(params["bc"][0])
    vslab = vslab.at[1, 0:C_OUT].set(params["be"][0] * 2.0)     # fold `x += x`
    vslab = vslab.at[2, 0:F2].set(params["b1"][0])
    vslab = vslab.at[3, 0:F2].set(params["b2"][0])
    vslab = vslab.at[4, 0:F2].set(params["g3"][0])
    vslab = vslab.at[5, 0:F2].set(params["beta3"][0])
    vslab = vslab.at[6, 0:F2].set(params["wi"][:, 0])
    vslab = vslab.at[7, 0:NUM_CLASSES].set(params["bp"][0])
    vslab = vslab.at[V_ROWS_FIXED:V_ROWS_FIXED + bb * P, 0:C_OUT].set(
        jnp.tile(params["pos"], (bb, 1)))
    return wslab, vslab


def neuronet_forward(x, params, bb=None):
    # Per performance review: run the whole (tiny, latency-bound) batch in ONE
    # grid step on all generations — the v7x 2-TC split's extra launch and
    # duplicated constant DMAs exceed the parallelism gain at this size.
    if bb is None:
        bb = B
    assert B % bb == 0
    nsteps = B // bb

    patches = im2col(x).reshape(B * P, K).astype(jnp.bfloat16)   # (B*P, K)
    sblk = build_pair_selector(bb).astype(jnp.bfloat16)          # 0/1 exact in bf16
    wslab, vslab = pack_params(params, bb)

    out = pl.pallas_call(
        make_kernel(bb),
        grid=(nsteps,),
        in_specs=[
            pl.BlockSpec((bb * P, K), lambda i: (i, 0)),              # patches block
            pl.BlockSpec((bb * T, 2 * bb * P), lambda i: (0, 0)),     # pair selector
            pl.BlockSpec((K, W_SLAB_COLS), lambda i: (0, 0)),         # weight slab (bf16)
            pl.BlockSpec((V_ROWS_FIXED + bb * P, 128), lambda i: (0, 0)),  # vector slab (f32)
        ],
        out_specs=pl.BlockSpec((bb, OUT_COLS), lambda i: (i, 0)),     # flat 2D output
        out_shape=jax.ShapeDtypeStruct((B, OUT_COLS), jnp.float32),
        scratch_shapes=[pltpu.VMEM((bb * T, F2), jnp.float32)],       # VMEM home for pc
        compiler_params=pltpu.CompilerParams(
            dimension_semantics=("arbitrary",)),
    )(patches, sblk, wslab, vslab)

    y_hat = out[:, :NUM_CLASSES]
    attn = out[:, 128:128 + T]
    # mirror PyTorch return: (y_hat (B, num_classes), (None, attention (B, T)))
    return y_hat, (None, attn)


# ---------------- pure-JAX (f32) reference for a sanity check -----------------
def reference(x, params, rows_ix, cols_ix):
    patches = im2col(x)
    feat = jnp.maximum(patches @ params["wc"] + params["bc"], 0.0)
    feat = feat + params["pos"][None]
    emb = jnp.maximum(feat @ params["we"] + params["be"], 0.0) * 2.0
    pc = jnp.concatenate([emb[:, rows_ix], emb[:, cols_ix]], axis=-1)   # (B, T, 2C)
    h = jnp.maximum(pc @ params["w1"] + params["b1"], 0.0)
    ce = h @ params["w2"] + params["b2"]
    mu = ce.mean(-1, keepdims=True)
    var = ((ce - mu) ** 2).mean(-1, keepdims=True)
    ln = (ce - mu) / jnp.sqrt(var + EPS) * params["g3"] + params["beta3"]
    pc2 = ln + pc
    logits = pc2 @ params["wi"]                                         # (B, T, 1)
    attn = jax.nn.softmax(logits, axis=1)
    pooled = jnp.sum(attn * pc, axis=1)                                 # (B, 2C)
    y = pooled @ params["wp"] + params["bp"]
    return y, attn[..., 0]


if __name__ == "__main__":
    key = jax.random.PRNGKey(0)
    k_x, k_p = jax.random.split(key)
    x = jax.random.normal(k_x, (B, C_IN, H, W), jnp.float32)   # NCHW, like PyTorch
    params = init_params(k_p)

    y_hat, (_, attention) = neuronet_forward(x, params)
    y_hat = jax.block_until_ready(y_hat)
    attention = jax.block_until_ready(attention)

    rows_ix, cols_ix = np.tril_indices(P, k=-1)
    y_ref, attn_ref = reference(x, params,
                                jnp.asarray(rows_ix, jnp.int32),
                                jnp.asarray(cols_ix, jnp.int32))
    assert y_hat.shape == (B, NUM_CLASSES)
    assert attention.shape == (B, T)
    # Tolerances account for bf16 MXU operands (f32 accumulation, f32 reference).
    np.testing.assert_allclose(np.asarray(y_hat), np.asarray(y_ref),
                               rtol=2e-2, atol=5e-3)
    np.testing.assert_allclose(np.asarray(attention), np.asarray(attn_ref),
                               rtol=2e-2, atol=5e-4)
    print("KERNEL_OK")
</pallas_src>

<mosaic_0001>
module attributes {stable_mosaic.version = 11 : i64} {
  func.func @kernel(%arg0: i32, %arg1: memref<32x64xbf16, #tpu.memory_space<vmem>>, %arg2: memref<240x64xbf16, #tpu.memory_space<vmem>>, %arg3: memref<64x640xbf16, #tpu.memory_space<vmem>>, %arg4: memref<40x128xf32, #tpu.memory_space<vmem>>, %arg5: memref<2x256xf32, #tpu.memory_space<vmem>>, %arg6: memref<240x64xf32, #tpu.memory_space<vmem>>) attributes {dimension_semantics = [#tpu.dimension_semantics<arbitrary>], iteration_bounds = array<i64: 1>, scalar_prefetch = 0 : i64, scratch_operands = 1 : i64, tpu.core_type = #tpu.core_type<tc>, window_params = [{transform_indices = @transform_0, window_bounds = array<i64: 32, 64>}, {pipeline_mode = #tpu.pipeline_mode<synchronous>, transform_indices = @transform_1, window_bounds = array<i64: 240, 64>}, {pipeline_mode = #tpu.pipeline_mode<synchronous>, transform_indices = @transform_2, window_bounds = array<i64: 64, 640>}, {pipeline_mode = #tpu.pipeline_mode<synchronous>, transform_indices = @transform_3, window_bounds = array<i64: 40, 128>}, {transform_indices = @transform_4, window_bounds = array<i64: 2, 256>}]} {
    %c0 = arith.constant 0 : index
    %c0_0 = arith.constant 0 : index
    %0 = vector.load %arg1[%c0, %c0_0] : memref<32x64xbf16, #tpu.memory_space<vmem>>, vector<32x64xbf16>
    %c0_1 = arith.constant 0 : index
    %c0_2 = arith.constant 0 : index
    %1 = vector.load %arg3[%c0_1, %c0_2] : memref<64x640xbf16, #tpu.memory_space<vmem>>, vector<64x32xbf16>
    %c0_3 = arith.constant 0 : index
    %c0_4 = arith.constant 0 : index
    %2 = vector.load %arg4[%c0_3, %c0_4] : memref<40x128xf32, #tpu.memory_space<vmem>>, vector<1x32xf32>
    %c8 = arith.constant 8 : index
    %c0_5 = arith.constant 0 : index
    %3 = vector.load %arg4[%c8, %c0_5] : memref<40x128xf32, #tpu.memory_space<vmem>>, vector<32x32xf32>
    %cst = arith.constant dense<0.000000e+00> : vector<32x32xf32>
    %4 = tpu.matmul %0, %1, %cst {dimension_numbers = #tpu.dot_dimension_numbers<[1], [0], [0], [1], [0, 0, 1, 1], [], []>} : vector<32x64xbf16>, vector<64x32xbf16>, vector<32x32xf32> -> vector<32x32xf32>
    %5 = vector.broadcast %2 : vector<1x32xf32> to vector<32x32xf32>
    %6 = arith.addf %4, %5 : vector<32x32xf32>
    %cst_6 = arith.constant 0.000000e+00 : f32
    %7 = vector.broadcast %cst_6 : f32 to vector<32x32xf32>
    %8 = arith.maximumf %6, %7 : vector<32x32xf32>
    %9 = arith.addf %8, %3 : vector<32x32xf32>
    %c0_7 = arith.constant 0 : index
    %c128 = arith.constant 128 : index
    %10 = vector.load %arg3[%c0_7, %c128] : memref<64x640xbf16, #tpu.memory_space<vmem>>, vector<32x32xbf16>
    %c1 = arith.constant 1 : index
    %c0_8 = arith.constant 0 : index
    %11 = vector.load %arg4[%c1, %c0_8] : memref<40x128xf32, #tpu.memory_space<vmem>>, vector<1x32xf32>
    %12 = arith.truncf %9 : vector<32x32xf32> to vector<32x32xbf16>
    %cst_9 = arith.constant dense<0.000000e+00> : vector<32x32xf32>
    %13 = tpu.matmul %12, %10, %cst_9 {dimension_numbers = #tpu.dot_dimension_numbers<[1], [0], [0], [1], [0, 0, 1, 1], [], []>} : vector<32x32xbf16>, vector<32x32xbf16>, vector<32x32xf32> -> vector<32x32xf32>
    %14 = vector.broadcast %11 : vector<1x32xf32> to vector<32x32xf32>
    %15 = arith.addf %13, %14 : vector<32x32xf32>
    %cst_10 = arith.constant 0.000000e+00 : f32
    %16 = vector.broadcast %cst_10 : f32 to vector<32x32xf32>
    %17 = arith.maximumf %15, %16 : vector<32x32xf32>
    %18 = arith.truncf %17 : vector<32x32xf32> to vector<32x32xbf16>
    %cst_11 = arith.constant 0.000000e+00 : bf16
    %19 = vector.broadcast %cst_11 : bf16 to vector<32x32xbf16>
    %20 = tpu.concatenate %18, %19 in 1 : vector<32x32xbf16>, vector<32x32xbf16> -> vector<32x64xbf16>
    %21 = tpu.concatenate %19, %18 in 1 : vector<32x32xbf16>, vector<32x32xbf16> -> vector<32x64xbf16>
    %22 = tpu.concatenate %20, %21 in 0 : vector<32x64xbf16>, vector<32x64xbf16> -> vector<64x64xbf16>
    %c0_12 = arith.constant 0 : index
    %c0_13 = arith.constant 0 : index
    %23 = vector.load %arg2[%c0_12, %c0_13] : memref<240x64xbf16, #tpu.memory_space<vmem>>, vector<240x64xbf16>
    %cst_14 = arith.constant dense<0.000000e+00> : vector<240x64xf32>
    %24 = tpu.matmul %23, %22, %cst_14 {dimension_numbers = #tpu.dot_dimension_numbers<[1], [0], [0], [1], [0, 0, 1, 1], [], []>} : vector<240x64xbf16>, vector<64x64xbf16>, vector<240x64xf32> -> vector<240x64xf32>
    %c0_15 = arith.constant 0 : index
    %c0_16 = arith.constant 0 : index
    %25 = vector.load %arg6[%c0_15, %c0_16] : memref<240x64xf32, #tpu.memory_space<vmem>>, vector<240x64xf32>
    tpu.vector_store %arg6[%c0_15, %c0_16], %24 {strides = array<i32>} : memref<240x64xf32, #tpu.memory_space<vmem>>, vector<240x64xf32>,
    %c0_17 = arith.constant 0 : index
    %c256 = arith.constant 256 : index
    %26 = vector.load %arg3[%c0_17, %c256] : memref<64x640xbf16, #tpu.memory_space<vmem>>, vector<64x64xbf16>
    %c2 = arith.constant 2 : index
    %c0_18 = arith.constant 0 : index
    %27 = vector.load %arg4[%c2, %c0_18] : memref<40x128xf32, #tpu.memory_space<vmem>>, vector<1x64xf32>
    %c0_19 = arith.constant 0 : index
    %c384 = arith.constant 384 : index
    %28 = vector.load %arg3[%c0_19, %c384] : memref<64x640xbf16, #tpu.memory_space<vmem>>, vector<64x64xbf16>
    %c3 = arith.constant 3 : index
    %c0_20 = arith.constant 0 : index
    %29 = vector.load %arg4[%c3, %c0_20] : memref<40x128xf32, #tpu.memory_space<vmem>>, vector<1x64xf32>
    %30 = arith.truncf %24 : vector<240x64xf32> to vector<240x64xbf16>
    %cst_21 = arith.constant dense<0.000000e+00> : vector<240x64xf32>
    %31 = tpu.matmul %30, %26, %cst_21 {dimension_numbers = #tpu.dot_dimension_numbers<[1], [0], [0], [1], [0, 0, 1, 1], [], []>} : vector<240x64xbf16>, vector<64x64xbf16>, vector<240x64xf32> -> vector<240x64xf32>
    %32 = vector.broadcast %27 : vector<1x64xf32> to vector<240x64xf32>
    %33 = arith.addf %31, %32 : vector<240x64xf32>
    %cst_22 = arith.constant 0.000000e+00 : f32
    %34 = vector.broadcast %cst_22 : f32 to vector<240x64xf32>
    %35 = arith.maximumf %33, %34 : vector<240x64xf32>
    %36 = arith.truncf %35 : vector<240x64xf32> to vector<240x64xbf16>
    %cst_23 = arith.constant dense<0.000000e+00> : vector<240x64xf32>
    %37 = tpu.matmul %36, %28, %cst_23 {dimension_numbers = #tpu.dot_dimension_numbers<[1], [0], [0], [1], [0, 0, 1, 1], [], []>} : vector<240x64xbf16>, vector<64x64xbf16>, vector<240x64xf32> -> vector<240x64xf32>
    %38 = vector.broadcast %29 : vector<1x64xf32> to vector<240x64xf32>
    %39 = arith.addf %37, %38 : vector<240x64xf32>
    %c4 = arith.constant 4 : index
    %c0_24 = arith.constant 0 : index
    %40 = vector.load %arg4[%c4, %c0_24] : memref<40x128xf32, #tpu.memory_space<vmem>>, vector<1x64xf32>
    %c5 = arith.constant 5 : index
    %c0_25 = arith.constant 0 : index
    %41 = vector.load %arg4[%c5, %c0_25] : memref<40x128xf32, #tpu.memory_space<vmem>>, vector<1x64xf32>
    %cst_26 = arith.constant dense<0.000000e+00> : vector<240xf32>
    %42 = vector.multi_reduction <add>, %39, %cst_26 [1] : vector<240x64xf32> to vector<240xf32>
    %43 = vector.shape_cast %42 : vector<240xf32> to vector<240x1xf32>
    %cst_27 = arith.constant 6.400000e+01 : f32
    %44 = vector.broadcast %cst_27 : f32 to vector<240x1xf32>
    %45 = arith.divf %43, %44 : vector<240x1xf32>
    %46 = vector.broadcast %45 : vector<240x1xf32> to vector<240x64xf32>
    %47 = arith.subf %39, %46 : vector<240x64xf32>
    %48 = arith.mulf %47, %47 : vector<240x64xf32>
    %cst_28 = arith.constant dense<0.000000e+00> : vector<240xf32>
    %49 = vector.multi_reduction <add>, %48, %cst_28 [1] : vector<240x64xf32> to vector<240xf32>
    %50 = vector.shape_cast %49 : vector<240xf32> to vector<240x1xf32>
    %cst_29 = arith.constant 6.400000e+01 : f32
    %51 = vector.broadcast %cst_29 : f32 to vector<240x1xf32>
    %52 = arith.divf %50, %51 : vector<240x1xf32>
    %53 = vector.broadcast %45 : vector<240x1xf32> to vector<240x64xf32>
    %54 = arith.subf %39, %53 : vector<240x64xf32>
    %cst_30 = arith.constant 9.99999974E-6 : f32
    %55 = vector.broadcast %cst_30 : f32 to vector<240x1xf32>
    %56 = arith.addf %52, %55 : vector<240x1xf32>
    %57 = math.rsqrt %56 : vector<240x1xf32>
    %58 = vector.broadcast %57 : vector<240x1xf32> to vector<240x64xf32>
    %59 = arith.mulf %54, %58 : vector<240x64xf32>
    %60 = vector.broadcast %40 : vector<1x64xf32> to vector<240x64xf32>
    %61 = arith.mulf %59, %60 : vector<240x64xf32>
    %62 = vector.broadcast %41 : vector<1x64xf32> to vector<240x64xf32>
    %63 = arith.addf %61, %62 : vector<240x64xf32>
    %c0_31 = arith.constant 0 : index
    %c0_32 = arith.constant 0 : index
    %64 = vector.load %arg6[%c0_31, %c0_32] : memref<240x64xf32, #tpu.memory_space<vmem>>, vector<240x64xf32>
    %65 = arith.addf %63, %64 : vector<240x64xf32>
    %c6 = arith.constant 6 : index
    %c0_33 = arith.constant 0 : index
    %66 = vector.load %arg4[%c6, %c0_33] : memref<40x128xf32, #tpu.memory_space<vmem>>, vector<1x64xf32>
    %67 = vector.broadcast %66 : vector<1x64xf32> to vector<240x64xf32>
    %68 = arith.mulf %65, %67 : vector<240x64xf32>
    %69 = vector.shape_cast %68 : vector<240x64xf32> to vector<2x120x64xf32>
    %cst_34 = arith.constant dense<0.000000e+00> : vector<2x120xf32>
    %70 = vector.multi_reduction <add>, %69, %cst_34 [2] : vector<2x120x64xf32> to vector<2x120xf32>
    %cst_35 = arith.constant dense<0xFF800000> : vector<2xf32>
    %71 = vector.multi_reduction <maximumf>, %70, %cst_35 [1] : vector<2x120xf32> to vector<2xf32>
    %72 = vector.shape_cast %71 : vector<2xf32> to vector<2x1xf32>
    %73 = vector.broadcast %72 : vector<2x1xf32> to vector<2x120xf32>
    %74 = arith.subf %70, %73 : vector<2x120xf32>
    %75 = math.exp %74 : vector<2x120xf32>
    %cst_36 = arith.constant dense<0.000000e+00> : vector<2xf32>
    %76 = vector.multi_reduction <add>, %75, %cst_36 [1] : vector<2x120xf32> to vector<2xf32>
    %77 = vector.shape_cast %76 : vector<2xf32> to vector<2x1xf32>
    %78 = vector.broadcast %77 : vector<2x1xf32> to vector<2x120xf32>
    %79 = arith.divf %75, %78 : vector<2x120xf32>
    %80 = tpu.concatenate %79, %79 in 1 : vector<2x120xf32>, vector<2x120xf32> -> vector<2x240xf32>
    %81 = tpu.iota {dimensions = array<i32: 1>} : vector<2x240xi32>
    %82 = tpu.iota {dimensions = array<i32: 0>} : vector<2x240xi32>
    %c120_i32 = arith.constant 120 : i32
    %83 = vector.broadcast %c120_i32 : i32 to vector<2x240xi32>
    %84 = arith.muli %82, %83 : vector<2x240xi32>
    %85 = arith.cmpi sge, %81, %84 : vector<2x240xi32>
    %c1_i32 = arith.constant 1 : i32
    %86 = vector.broadcast %c1_i32 : i32 to vector<2x240xi32>
    %87 = arith.addi %82, %86 : vector<2x240xi32>
    %c120_i32_37 = arith.constant 120 : i32
    %88 = vector.broadcast %c120_i32_37 : i32 to vector<2x240xi32>
    %89 = arith.muli %87, %88 : vector<2x240xi32>
    %90 = arith.cmpi slt, %81, %89 : vector<2x240xi32>
    %91 = arith.andi %85, %90 : vector<2x240xi1>
    %cst_38 = arith.constant 0.000000e+00 : f32
    %92 = vector.broadcast %cst_38 : f32 to vector<2x240xf32>
    %93 = arith.select %91, %80, %92 : vector<2x240xi1>, vector<2x240xf32>
    %94 = arith.truncf %93 : vector<2x240xf32> to vector<2x240xbf16>
    %c0_39 = arith.constant 0 : index
    %c0_40 = arith.constant 0 : index
    %95 = vector.load %arg6[%c0_39, %c0_40] : memref<240x64xf32, #tpu.memory_space<vmem>>, vector<240x64xf32>
    %96 = arith.truncf %95 : vector<240x64xf32> to vector<240x64xbf16>
    %cst_41 = arith.constant dense<0.000000e+00> : vector<2x64xf32>
    %97 = tpu.matmul %94, %96, %cst_41 {dimension_numbers = #tpu.dot_dimension_numbers<[1], [0], [0], [1], [0, 0, 1, 1], [], []>} : vector<2x240xbf16>, vector<240x64xbf16>, vector<2x64xf32> -> vector<2x64xf32>
    %c0_42 = arith.constant 0 : index
    %c512 = arith.constant 512 : index
    %98 = vector.load %arg3[%c0_42, %c512] : memref<64x640xbf16, #tpu.memory_space<vmem>>, vector<64x10xbf16>
    %c7 = arith.constant 7 : index
    %c0_43 = arith.constant 0 : index
    %99 = vector.load %arg4[%c7, %c0_43] : memref<40x128xf32, #tpu.memory_space<vmem>>, vector<1x10xf32>
    %100 = arith.truncf %97 : vector<2x64xf32> to vector<2x64xbf16>
    %cst_44 = arith.constant dense<0.000000e+00> : vector<2x10xf32>
    %101 = tpu.matmul %100, %98, %cst_44 {dimension_numbers = #tpu.dot_dimension_numbers<[1], [0], [0], [1], [0, 0, 1, 1], [], []>} : vector<2x64xbf16>, vector<64x10xbf16>, vector<2x10xf32> -> vector<2x10xf32>
    %102 = vector.broadcast %99 : vector<1x10xf32> to vector<2x10xf32>
    %103 = arith.addf %101, %102 : vector<2x10xf32>
    %cst_45 = arith.constant 0.000000e+00 : f32
    %104 = vector.broadcast %cst_45 : f32 to vector<2x118xf32>
    %105 = tpu.concatenate %103, %104 in 1 : vector<2x10xf32>, vector<2x118xf32> -> vector<2x128xf32>
    %cst_46 = arith.constant 0.000000e+00 : f32
    %106 = vector.broadcast %cst_46 : f32 to vector<2x8xf32>
    %107 = tpu.concatenate %79, %106 in 1 : vector<2x120xf32>, vector<2x8xf32> -> vector<2x128xf32>
    %108 = tpu.concatenate %105, %107 in 1 : vector<2x128xf32>, vector<2x128xf32> -> vector<2x256xf32>
    %c0_47 = arith.constant 0 : index
    %c0_48 = arith.constant 0 : index
    %109 = vector.load %arg5[%c0_47, %c0_48] : memref<2x256xf32, #tpu.memory_space<vmem>>, vector<2x256xf32>
    tpu.vector_store %arg5[%c0_47, %c0_48], %108 {strides = array<i32>} : memref<2x256xf32, #tpu.memory_space<vmem>>, vector<2x256xf32>,
    return
  }
  func.func @transform_0(%arg0: i32) -> (i32, i32) {
    %c0_i32 = arith.constant 0 : i32
    %c0_i32_0 = arith.constant 0 : i32
    return %arg0, %c0_i32 : i32, i32
  }
  func.func @transform_1(%arg0: i32) -> (i32, i32) {
    %c0_i32 = arith.constant 0 : i32
    %c0_i32_0 = arith.constant 0 : i32
    %c0_i32_1 = arith.constant 0 : i32
    return %c0_i32, %c0_i32_0 : i32, i32
  }
  func.func @transform_2(%arg0: i32) -> (i32, i32) {
    %c0_i32 = arith.constant 0 : i32
    %c0_i32_0 = arith.constant 0 : i32
    %c0_i32_1 = arith.constant 0 : i32
    return %c0_i32, %c0_i32_0 : i32, i32
  }
  func.func @transform_3(%arg0: i32) -> (i32, i32) {
    %c0_i32 = arith.constant 0 : i32
    %c0_i32_0 = arith.constant 0 : i32
    %c0_i32_1 = arith.constant 0 : i32
    return %c0_i32, %c0_i32_0 : i32, i32
  }
  func.func @transform_4(%arg0: i32) -> (i32, i32) {
    %c0_i32 = arith.constant 0 : i32
    %c0_i32_0 = arith.constant 0 : i32
    return %arg0, %c0_i32 : i32, i32
  }
}

</mosaic_0001>

<llo_original>
// kernel: tpu_custom_call.1
$region0: #{tpu_custom_call.1}
  #allocation0 [shape = 'u32[]', space=smem, size = 0x4, offset = 0x4, fixed_abs, tag = 'smem constant byte address 0x4 - core index']
  #allocation1 [shape = 'u32[144,128]{1,0:T(1,128)}', space=vmem, size = 0x12000, scoped, tag = 'internal scratch']
  #allocation2 [shape = 'f32[240,64]{1,0:T(8,128)}', space=vmem, size = 0x1e000, scoped, tag = 'scratch operand']
  %s0 = inlined_call_operand.vmem [shape: bf16[32,64], index: 0, kind: input, shape index: {}]
  %s1 = inlined_call_operand.vmem [shape: bf16[240,64], index: 1, kind: input, shape index: {}]
  %s2 = inlined_call_operand.vmem [shape: bf16[64,640], index: 2, kind: input, shape index: {}]
  %s3 = inlined_call_operand.hbm [shape: f32[40,128], index: 3, kind: input, shape index: {}]
  %s4 = inlined_call_operand.hbm [shape: f32[2,256], index: 4, kind: output, shape index: {}]
  %s5 = sld [smem:[#allocation0]]
  $region30: #{tpu_custom_call.1} parent=0
    _
  %s7 = ssub.s32 1, %s5
  %s8 = scalar_select 0, %s7, %s5
  $region1: #{tpu_custom_call.1} parent=0
    #allocation3 [shape = 'u8[20480]{0}', space=vmem, size = 0x5000, scoped, tag = 'input window, operand 3, single buffered']
    #allocation4 [shape = 's32[1]{0}', space=sflag, size = 0x4, scoped, tag = 'scoped memory for tpu_custom_call.1']
    #allocation5 [shape = 's32[1]{0}', space=sflag, size = 0x4, scoped, tag = 'scoped memory for tpu_custom_call.1']
    #allocation6 [shape = 'u8[2048]{0}', space=vmem, size = 0x800, scoped, tag = 'output window, operand 0, single buffered']
    %9 = vsyncpa [#allocation4], 0
    %10 = vsyncpa [#allocation5], 0
    // Predicated region
    $region2: #{tpu_custom_call.1} parent=1 // pred_check
      _
    $region3: #{tpu_custom_call.1} parent=1 // pred_check_branch
      %12 = sbr.rel (0) target = $region5
    $region4: #{tpu_custom_call.1} parent=1 // pred_region
      _
    $region5: #{tpu_custom_call.1} parent=1 // pred_fallthru
      _
    // Predicated region
    $region6: #{tpu_custom_call.1} parent=1 // pred_check
      _
    $region7: #{tpu_custom_call.1} parent=1 // pred_check_branch
      %14 = sbr.rel (0) target = $region9
    $region8: #{tpu_custom_call.1} parent=1 // pred_region
      _
    $region9: #{tpu_custom_call.1} parent=1 // pred_fallthru
      _
    // Predicated region
    $region10: #{tpu_custom_call.1} parent=1 // pred_check
      _
    $region11: #{tpu_custom_call.1} parent=1 // pred_check_branch
      %16 = sbr.rel (0) target = $region13
    $region12: #{tpu_custom_call.1} parent=1 // pred_region
      _
    $region13: #{tpu_custom_call.1} parent=1 // pred_fallthru
      _
    // Predicated region
    $region14: #{tpu_custom_call.1} parent=1 // pred_check
      _
    $region15: #{tpu_custom_call.1} parent=1 // pred_check_branch
      %18 = sbr.rel (0) target = $region17
    $region16: #{tpu_custom_call.1} parent=1 // pred_region
      %s20 = ssub.s32 640, 640
      %21 = vsyncadd [#allocation4], %s20
      %s22 = sshll.u32 [#allocation3], 4
      %s23 = int_to_ptr.vmem [resolvable:$true] %s22
      %28 = dma.hbm_to_vmem [thread:$0]  %s3, 640, %s23, [#allocation4], 128, 128, 8
    $region17: #{tpu_custom_call.1} parent=1 // pred_fallthru
      _
    // Predicated region
    $region18: #{tpu_custom_call.1} parent=1 // pred_check
      _
    $region19: #{tpu_custom_call.1} parent=1 // pred_check_branch
      %30 = sbr.rel (0) target = $region21
    $region20: #{tpu_custom_call.1} parent=1 // pred_region
      %31 = dma.done [#allocation4], 640
    $region21: #{tpu_custom_call.1} parent=1 // pred_fallthru
      _
    %v33 = vld [vmem:[%s0] sm:$0xf]
    %v34 = vld [vmem:[%s0 + $0x4] sm:$0xf]
    %v35 = vld [vmem:[%s0 + $0x8] sm:$0xf]
    %v36 = vld [vmem:[%s0 + $0xc] sm:$0xf]
    %v37 = vld [vmem:[%s2] sm:$0xf]
    %v38 = vld [vmem:[%s2 + $0x14] sm:$0xf]
    %v39 = vld [vmem:[%s2 + $0x28] sm:$0xf]
    %v40 = vld [vmem:[%s2 + $0x3c] sm:$0xf]
    %v41 = vld [vmem:[%s2 + $0x50] sm:$0xf]
    %v42 = vld [vmem:[%s2 + $0x64] sm:$0xf]
    %v43 = vld [vmem:[%s2 + $0x78] sm:$0xf]
    %v44 = vld [vmem:[%s2 + $0x8c] sm:$0xf]
    %v45 = vld [vmem:[#allocation3] sm:$0x1]
    %v46 = vld [vmem:[#allocation3 + $0x8] sm:$0xff]
    %v47 = vld [vmem:[#allocation3 + $0x10] sm:$0xff]
    %v48 = vld [vmem:[#allocation3 + $0x18] sm:$0xff]
    %v49 = vld [vmem:[#allocation3 + $0x20] sm:$0xff]
    %v50 = vlaneseq
    %v51 = vshrl.u32 %v50, 7
    %v52 = vsub.s32 0, %v51
    %v53 = vrot.slane %v45, %v52
    %v58 = vunpack.c.l.b16 %v33
    %v59 = vunpack.c.l.b16 %v34
    %v60 = vunpack.c.l.b16 %v35
    %v61 = vunpack.c.l.b16 %v36
    %v62 = vpack.c.b16 %v59, %v58
    %v63 = vpack.c.b16 %v61, %v60
    %v72 = vunpack.c.l.b16 %v37
    %v73 = vunpack.c.l.b16 %v38
    %v74 = vunpack.c.l.b16 %v39
    %v75 = vunpack.c.l.b16 %v40
    %v76 = vunpack.c.l.b16 %v41
    %v77 = vunpack.c.l.b16 %v42
    %v78 = vunpack.c.l.b16 %v43
    %v79 = vunpack.c.l.b16 %v44
    %v80 = vpack.c.b16 %v73, %v72
    %v81 = vpack.c.b16 %v75, %v74
    %v82 = vpack.c.b16 %v77, %v76
    %v83 = vpack.c.b16 %v79, %v78
    %vm88 = vcmask 523264
    %v90 = vsel %vm88, %v62, 0
    %v93 = vsel %vm88, %v63, 0
    %95 = vmatprep.subr.bf16.mxu0 0
    %96 = vmatpush1.bf16.msra.mxu0 %v80
    %97 = vmatprep.subr.bf16.mxu0 0
    %98 = vmatpush1.bf16.msra.mxu0 %v81
    %99 = vmatprep.subr.bf16.mxu0 0
    %100 = vmatpush1.bf16.msra.mxu0 %v82
    %101 = vmatprep.subr.bf16.mxu0 0
    %102 = vmatpush1.bf16.msra.mxu0 %v83
    %103 = vmatprep.subr.bf16.mxu0 0
    %104 = vmatpush1.bf16.msra.mxu0 0
    %105 = vmatprep.subr.bf16.mxu0 0
    %106 = vmatpush1.bf16.msra.mxu0 0
    %107 = vmatprep.subr.bf16.mxu0 0
    %108 = vmatpush1.bf16.msra.mxu0 0
    %109 = vmatprep.subr.bf16.mxu0 0
    %110 = vmatpush1.bf16.msra.mxu0 0
    %111 = vmatprep.subr.bf16.mxu0 0
    %112 = vmatpush1.bf16.msra.mxu0 0
    %113 = vmatprep.subr.bf16.mxu0 0
    %114 = vmatpush1.bf16.msra.mxu0 0
    %115 = vmatprep.subr.bf16.mxu0 0
    %116 = vmatpush1.bf16.msra.mxu0 0
    %117 = vmatprep.subr.bf16.mxu0 0
    %118 = vmatpush1.bf16.msra.mxu0 0
    %119 = vmatprep.subr.bf16.mxu0 0
    %120 = vmatpush1.bf16.msra.mxu0 0
    %121 = vmatprep.subr.bf16.mxu0 0
    %122 = vmatpush1.bf16.msra.mxu0 0
    %123 = vmatprep.subr.bf16.mxu0 0
    %124 = vmatpush1.bf16.msra.mxu0 0
    %125 = vmatprep.subr.bf16.mxu0 0
    %126 = vmatpush1.bf16.msra.mxu0 0
    %127 = vmatprep.mubr.bf16.mxu0 0
    %128 = vmatmul.mubr.bf16.gmra.mrb[0].mxu0 %v90
    %v129 = vpop.f32.mrb[0].mxu0
    %v130 = vadd.f32 %v53, %v129
    %v131 = vpop.f32.mrb[0].mxu0
    %v132 = vpop.f32.mrb[0].mxu0
    %v133 = vadd.f32 %v53, %v132
    %v134 = vpop.f32.mrb[0].mxu0
    %135 = vmatprep.mubr.bf16.mxu0 0
    %136 = vmatmul.mubr.bf16.gmra.mrb[0].mxu0 %v93
    %v137 = vpop.f32.mrb[0].mxu0
    %v138 = vadd.f32 %v53, %v137
    %v139 = vpop.f32.mrb[0].mxu0
    %v140 = vpop.f32.mrb[0].mxu0
    %v141 = vadd.f32 %v53, %v140
    %v142 = vpop.f32.mrb[0].mxu0
    %143 = vdwg.mxu0
    %v144 = vmax.f32 %v130, 0.0
    %v145 = vmax.f32 %v133, 0.0
    %v146 = vmax.f32 %v138, 0.0
    %v147 = vmax.f32 %v141, 0.0
    %v148 = vadd.f32 %v144, %v46
    %v149 = vadd.f32 %v145, %v47
    %v150 = vadd.f32 %v146, %v48
    %v151 = vadd.f32 %v147, %v49
    %v152 = vld [vmem:[%s2 + $0x4] sm:$0xf]
    %v153 = vld [vmem:[%s2 + $0x18] sm:$0xf]
    %v154 = vld [vmem:[%s2 + $0x2c] sm:$0xf]
    %v155 = vld [vmem:[%s2 + $0x40] sm:$0xf]
    %v156 = vld [vmem:[#allocation3 + $0x1] sm:$0x1]
    %v157 = vpack.c.bf16 %v149, %v148
    %v158 = vpack.c.bf16 %v151, %v150
    %v159 = vlaneseq
    %v160 = vshrl.u32 %v159, 7
    %v161 = vsub.s32 0, %v160
    %v162 = vrot.slane %v156, %v161
    %v167 = vunpack.c.l.b16 %v152
    %v168 = vunpack.c.l.b16 %v153
    %v169 = vunpack.c.l.b16 %v154
    %v170 = vunpack.c.l.b16 %v155
    %v171 = vpack.c.b16 %v168, %v167
    %v172 = vpack.c.b16 %v170, %v169
    %vm175 = vcmask 261120
    %v177 = vsel %vm175, %v157, 0
    %v180 = vsel %vm175, %v158, 0
    %182 = vmatprep.subr.bf16.mxu0 0
    %183 = vmatpush1.bf16.msra.mxu0 %v171
    %184 = vmatprep.subr.bf16.mxu0 0
    %185 = vmatpush1.bf16.msra.mxu0 %v172
    %186 = vmatprep.subr.bf16.mxu0 0
    %187 = vmatpush1.bf16.msra.mxu0 0
    %188 = vmatprep.subr.bf16.mxu0 0
    %189 = vmatpush1.bf16.msra.mxu0 0
    %190 = vmatprep.subr.bf16.mxu0 0
    %191 = vmatpush1.bf16.msra.mxu0 0
    %192 = vmatprep.subr.bf16.mxu0 0
    %193 = vmatpush1.bf16.msra.mxu0 0
    %194 = vmatprep.subr.bf16.mxu0 0
    %195 = vmatpush1.bf16.msra.mxu0 0
    %196 = vmatprep.subr.bf16.mxu0 0
    %197 = vmatpush1.bf16.msra.mxu0 0
    %198 = vmatprep.subr.bf16.mxu0 0
    %199 = vmatpush1.bf16.msra.mxu0 0
    %200 = vmatprep.subr.bf16.mxu0 0
    %201 = vmatpush1.bf16.msra.mxu0 0
    %202 = vmatprep.subr.bf16.mxu0 0
    %203 = vmatpush1.bf16.msra.mxu0 0
    %204 = vmatprep.subr.bf16.mxu0 0
    %205 = vmatpush1.bf16.msra.mxu0 0
    %206 = vmatprep.subr.bf16.mxu0 0
    %207 = vmatpush1.bf16.msra.mxu0 0
    %208 = vmatprep.subr.bf16.mxu0 0
    %209 = vmatpush1.bf16.msra.mxu0 0
    %210 = vmatprep.subr.bf16.mxu0 0
    %211 = vmatpush1.bf16.msra.mxu0 0
    %212 = vmatprep.subr.bf16.mxu0 0
    %213 = vmatpush1.bf16.msra.mxu0 0
    %214 = vmatprep.mubr.bf16.mxu0 0
    %215 = vmatmul.mubr.bf16.gmra.mrb[0].mxu0 %v177
    %v216 = vpop.f32.mrb[0].mxu0
    %v217 = vadd.f32 %v162, %v216
    %v218 = vpop.f32.mrb[0].mxu0
    %v219 = vpop.f32.mrb[0].mxu0
    %v220 = vadd.f32 %v162, %v219
    %v221 = vpop.f32.mrb[0].mxu0
    %222 = vmatprep.mubr.bf16.mxu0 0
    %223 = vmatmul.mubr.bf16.gmra.mrb[0].mxu0 %v180
    %v224 = vpop.f32.mrb[0].mxu0
    %v225 = vadd.f32 %v162, %v224
    %v226 = vpop.f32.mrb[0].mxu0
    %v227 = vpop.f32.mrb[0].mxu0
    %v228 = vadd.f32 %v162, %v227
    %v229 = vpop.f32.mrb[0].mxu0
    %230 = vdwg.mxu0
    %v231 = vmax.f32 %v217, 0.0
    %v232 = vmax.f32 %v220, 0.0
    %v233 = vmax.f32 %v225, 0.0
    %v234 = vmax.f32 %v228, 0.0
    %v235 = vpack.c.bf16 %v232, %v231
    %v236 = vpack.c.bf16 %v234, %v233
    %v239 = vsel %vm175, %v235, 0
    %v242 = vsel %vm175, %v236, 0
    %246 = vrot.lane.b32.xlu0 %v235, 32
    %v247 = vpop.permute.xlu0 %246
    %248 = vrot.lane.b32.xlu0 %v236, 32
    %v249 = vpop.permute.xlu0 %248
    %v251 = vsel %vm175, 0, %v247
    %v254 = vsel %vm175, 0, %v249
    %v256 = vld [vmem:[%s1] sm:$0xf]
    %v257 = vld [vmem:[%s1 + $0x4] sm:$0xf]
    %v258 = vld [vmem:[%s1 + $0x8] sm:$0xf]
    %v259 = vld [vmem:[%s1 + $0xc] sm:$0xf]
    %v260 = vld [vmem:[%s1 + $0x10] sm:$0xf]
    %v261 = vld [vmem:[%s1 + $0x14] sm:$0xf]
    %v262 = vld [vmem:[%s1 + $0x18] sm:$0xf]
    %v263 = vld [vmem:[%s1 + $0x1c] sm:$0xf]
    %v264 = vld [vmem:[%s1 + $0x20] sm:$0xf]
    %v265 = vld [vmem:[%s1 + $0x24] sm:$0xf]
    %v266 = vld [vmem:[%s1 + $0x28] sm:$0xf]
    %v267 = vld [vmem:[%s1 + $0x2c] sm:$0xf]
    %v268 = vld [vmem:[%s1 + $0x30] sm:$0xf]
    %v269 = vld [vmem:[%s1 + $0x34] sm:$0xf]
    %v270 = vld [vmem:[%s1 + $0x38] sm:$0xf]
    %v271 = vld [vmem:[%s1 + $0x3c] sm:$0xf]
    %v272 = vld [vmem:[%s1 + $0x40] sm:$0xf]
    %v273 = vld [vmem:[%s1 + $0x44] sm:$0xf]
    %v274 = vld [vmem:[%s1 + $0x48] sm:$0xf]
    %v275 = vld [vmem:[%s1 + $0x4c] sm:$0xf]
    %v276 = vld [vmem:[%s1 + $0x50] sm:$0xf]
    %v277 = vld [vmem:[%s1 + $0x54] sm:$0xf]
    %v278 = vld [vmem:[%s1 + $0x58] sm:$0xf]
    %v279 = vld [vmem:[%s1 + $0x5c] sm:$0xf]
    %v280 = vld [vmem:[%s1 + $0x60] sm:$0xf]
    %v281 = vld [vmem:[%s1 + $0x64] sm:$0xf]
    %v282 = vld [vmem:[%s1 + $0x68] sm:$0xf]
    %v283 = vld [vmem:[%s1 + $0x6c] sm:$0xf]
    %v284 = vld [vmem:[%s1 + $0x70] sm:$0xf]
    %v285 = vld [vmem:[%s1 + $0x74] sm:$0xf]
    %v316 = vunpack.c.l.b16 %v256
    %v317 = vunpack.c.l.b16 %v257
    %v318 = vunpack.c.l.b16 %v258
    %v319 = vunpack.c.l.b16 %v259
    %v320 = vunpack.c.l.b16 %v260
    %v321 = vunpack.c.l.b16 %v261
    %v322 = vunpack.c.l.b16 %v262
    %v323 = vunpack.c.l.b16 %v263
    %v324 = vunpack.c.l.b16 %v264
    %v325 = vunpack.c.l.b16 %v265
    %v326 = vunpack.c.l.b16 %v266
    %v327 = vunpack.c.l.b16 %v267
    %v328 = vunpack.c.l.b16 %v268
    %v329 = vunpack.c.l.b16 %v269
    %v330 = vunpack.c.l.b16 %v270
    %v331 = vunpack.c.l.b16 %v271
    %v332 = vunpack.c.l.b16 %v272
    %v333 = vunpack.c.l.b16 %v273
    %v334 = vunpack.c.l.b16 %v274
    %v335 = vunpack.c.l.b16 %v275
    %v336 = vunpack.c.l.b16 %v276
    %v337 = vunpack.c.l.b16 %v277
    %v338 = vunpack.c.l.b16 %v278
    %v339 = vunpack.c.l.b16 %v279
    %v340 = vunpack.c.l.b16 %v280
    %v341 = vunpack.c.l.b16 %v281
    %v342 = vunpack.c.l.b16 %v282
    %v343 = vunpack.c.l.b16 %v283
    %v344 = vunpack.c.l.b16 %v284
    %v345 = vunpack.c.l.b16 %v285
    %v346 = vpack.c.b16 %v317, %v316
    %v347 = vpack.c.b16 %v319, %v318
    %v348 = vpack.c.b16 %v321, %v320
    %v349 = vpack.c.b16 %v323, %v322
    %v350 = vpack.c.b16 %v325, %v324
    %v351 = vpack.c.b16 %v327, %v326
    %v352 = vpack.c.b16 %v329, %v328
    %v353 = vpack.c.b16 %v331, %v330
    %v354 = vpack.c.b16 %v333, %v332
    %v355 = vpack.c.b16 %v335, %v334
    %v356 = vpack.c.b16 %v337, %v336
    %v357 = vpack.c.b16 %v339, %v338
    %v358 = vpack.c.b16 %v341, %v340
    %v359 = vpack.c.b16 %v343, %v342
    %v360 = vpack.c.b16 %v345, %v344
    %v362 = vsel %vm88, %v346, 0
    %v365 = vsel %vm88, %v347, 0
    %v368 = vsel %vm88, %v348, 0
    %v371 = vsel %vm88, %v349, 0
    %v374 = vsel %vm88, %v350, 0
    %v377 = vsel %vm88, %v351, 0
    %v380 = vsel %vm88, %v352, 0
    %v383 = vsel %vm88, %v353, 0
    %v386 = vsel %vm88, %v354, 0
    %v389 = vsel %vm88, %v355, 0
    %v392 = vsel %vm88, %v356, 0
    %v395 = vsel %vm88, %v357, 0
    %v398 = vsel %vm88, %v358, 0
    %v401 = vsel %vm88, %v359, 0
    %v404 = vsel %vm88, %v360, 0
    %406 = vmatprep.subr.bf16.mxu0 0
    %407 = vmatpush1.bf16.msra.mxu0 %v239
    %408 = vmatprep.subr.bf16.mxu0 0
    %409 = vmatpush1.bf16.msra.mxu0 %v242
    %410 = vmatprep.subr.bf16.mxu0 0
    %411 = vmatpush1.bf16.msra.mxu0 %v251
    %412 = vmatprep.subr.bf16.mxu0 0
    %413 = vmatpush1.bf16.msra.mxu0 %v254
    %414 = vmatprep.subr.bf16.mxu0 0
    %415 = vmatpush1.bf16.msra.mxu0 0
    %416 = vmatprep.subr.bf16.mxu0 0
    %417 = vmatpush1.bf16.msra.mxu0 0
    %418 = vmatprep.subr.bf16.mxu0 0
    %419 = vmatpush1.bf16.msra.mxu0 0
    %420 = vmatprep.subr.bf16.mxu0 0
    %421 = vmatpush1.bf16.msra.mxu0 0
    %422 = vmatprep.subr.bf16.mxu0 0
    %423 = vmatpush1.bf16.msra.mxu0 0
    %424 = vmatprep.subr.bf16.mxu0 0
    %425 = vmatpush1.bf16.msra.mxu0 0
    %426 = vmatprep.subr.bf16.mxu0 0
    %427 = vmatpush1.bf16.msra.mxu0 0
    %428 = vmatprep.subr.bf16.mxu0 0
    %429 = vmatpush1.bf16.msra.mxu0 0
    %430 = vmatprep.subr.bf16.mxu0 0
    %431 = vmatpush1.bf16.msra.mxu0 0
    %432 = vmatprep.subr.bf16.mxu0 0
    %433 = vmatpush1.bf16.msra.mxu0 0
    %434 = vmatprep.subr.bf16.mxu0 0
    %435 = vmatpush1.bf16.msra.mxu0 0
    %436 = vmatprep.subr.bf16.mxu0 0
    %437 = vmatpush1.bf16.msra.mxu0 0
    %438 = vmatprep.mubr.bf16.mxu0 0
    %439 = vmatmul.mubr.bf16.gmra.mrb[0].mxu0 %v362
    %v440 = vpop.f32.mrb[0].mxu0
    %v441 = vadd.f32 0.0, %v440
    %v442 = vpop.f32.mrb[0].mxu0
    %v443 = vpop.f32.mrb[0].mxu0
    %v444 = vadd.f32 0.0, %v443
    %v445 = vpop.f32.mrb[0].mxu0
    %446 = vmatprep.mubr.bf16.mxu0 0
    %447 = vmatmul.mubr.bf16.gmra.mrb[0].mxu0 %v365
    %v448 = vpop.f32.mrb[0].mxu0
    %v449 = vadd.f32 0.0, %v448
    %v450 = vpop.f32.mrb[0].mxu0
    %v451 = vpop.f32.mrb[0].mxu0
    %v452 = vadd.f32 0.0, %v451
    %v453 = vpop.f32.mrb[0].mxu0
    %454 = vmatprep.mubr.bf16.mxu0 0
    %455 = vmatmul.mubr.bf16.gmra.mrb[0].mxu0 %v368
    %v456 = vpop.f32.mrb[0].mxu0
    %v457 = vadd.f32 0.0, %v456
    %v458 = vpop.f32.mrb[0].mxu0
    %v459 = vpop.f32.mrb[0].mxu0
    %v460 = vadd.f32 0.0, %v459
    %v461 = vpop.f32.mrb[0].mxu0
    %462 = vmatprep.mubr.bf16.mxu0 0
    %463 = vmatmul.mubr.bf16.gmra.mrb[0].mxu0 %v371
    %v464 = vpop.f32.mrb[0].mxu0
    %v465 = vadd.f32 0.0, %v464
    %v466 = vpop.f32.mrb[0].mxu0
    %v467 = vpop.f32.mrb[0].mxu0
    %v468 = vadd.f32 0.0, %v467
    %v469 = vpop.f32.mrb[0].mxu0
    %470 = vmatprep.mubr.bf16.mxu0 0
    %471 = vmatmul.mubr.bf16.gmra.mrb[0].mxu0 %v374
    %v472 = vpop.f32.mrb[0].mxu0
    %v473 = vadd.f32 0.0, %v472
    %v474 = vpop.f32.mrb[0].mxu0
    %v475 = vpop.f32.mrb[0].mxu0
    %v476 = vadd.f32 0.0, %v475
    %v477 = vpop.f32.mrb[0].mxu0
    %478 = vmatprep.mubr.bf16.mxu0 0
    %479 = vmatmul.mubr.bf16.gmra.mrb[0].mxu0 %v377
    %v480 = vpop.f32.mrb[0].mxu0
    %v481 = vadd.f32 0.0, %v480
    %v482 = vpop.f32.mrb[0].mxu0
    %v483 = vpop.f32.mrb[0].mxu0
    %v484 = vadd.f32 0.0, %v483
    %v485 = vpop.f32.mrb[0].mxu0
    %486 = vmatprep.mubr.bf16.mxu0 0
    %487 = vmatmul.mubr.bf16.gmra.mrb[0].mxu0 %v380
    %v488 = vpop.f32.mrb[0].mxu0
    %v489 = vadd.f32 0.0, %v488
    %v490 = vpop.f32.mrb[0].mxu0
    %v491 = vpop.f32.mrb[0].mxu0
    %v492 = vadd.f32 0.0, %v491
    %v493 = vpop.f32.mrb[0].mxu0
    %494 = vmatprep.mubr.bf16.mxu0 0
    %495 = vmatmul.mubr.bf16.gmra.mrb[0].mxu0 %v383
    %v496 = vpop.f32.mrb[0].mxu0
    %v497 = vadd.f32 0.0, %v496
    %v498 = vpop.f32.mrb[0].mxu0
    %v499 = vpop.f32.mrb[0].mxu0
    %v500 = vadd.f32 0.0, %v499
    %v501 = vpop.f32.mrb[0].mxu0
    %502 = vmatprep.mubr.bf16.mxu0 0
    %503 = vmatmul.mubr.bf16.gmra.mrb[0].mxu0 %v386
    %v504 = vpop.f32.mrb[0].mxu0
    %v505 = vadd.f32 0.0, %v504
    %v506 = vpop.f32.mrb[0].mxu0
    %v507 = vpop.f32.mrb[0].mxu0
    %v508 = vadd.f32 0.0, %v507
    %v509 = vpop.f32.mrb[0].mxu0
    %510 = vmatprep.mubr.bf16.mxu0 0
    %511 = vmatmul.mubr.bf16.gmra.mrb[0].mxu0 %v389
    %v512 = vpop.f32.mrb[0].mxu0
    %v513 = vadd.f32 0.0, %v512
    %v514 = vpop.f32.mrb[0].mxu0
    %v515 = vpop.f32.mrb[0].mxu0
    %v516 = vadd.f32 0.0, %v515
    %v517 = vpop.f32.mrb[0].mxu0
    %518 = vmatprep.mubr.bf16.mxu0 0
    %519 = vmatmul.mubr.bf16.gmra.mrb[0].mxu0 %v392
    %v520 = vpop.f32.mrb[0].mxu0
    %v521 = vadd.f32 0.0, %v520
    %v522 = vpop.f32.mrb[0].mxu0
    %v523 = vpop.f32.mrb[0].mxu0
    %v524 = vadd.f32 0.0, %v523
    %v525 = vpop.f32.mrb[0].mxu0
    %526 = vmatprep.mubr.bf16.mxu0 0
    %527 = vmatmul.mubr.bf16.gmra.mrb[0].mxu0 %v395
    %v528 = vpop.f32.mrb[0].mxu0
    %v529 = vadd.f32 0.0, %v528
    %v530 = vpop.f32.mrb[0].mxu0
    %v531 = vpop.f32.mrb[0].mxu0
    %v532 = vadd.f32 0.0, %v531
    %v533 = vpop.f32.mrb[0].mxu0
    %534 = vmatprep.mubr.bf16.mxu0 0
    %535 = vmatmul.mubr.bf16.gmra.mrb[0].mxu0 %v398
    %v536 = vpop.f32.mrb[0].mxu0
    %v537 = vadd.f32 0.0, %v536
    %v538 = vpop.f32.mrb[0].mxu0
    %v539 = vpop.f32.mrb[0].mxu0
    %v540 = vadd.f32 0.0, %v539
    %v541 = vpop.f32.mrb[0].mxu0
    %542 = vmatprep.mubr.bf16.mxu0 0
    %543 = vmatmul.mubr.bf16.gmra.mrb[0].mxu0 %v401
    %v544 = vpop.f32.mrb[0].mxu0
    %v545 = vadd.f32 0.0, %v544
    %v546 = vpop.f32.mrb[0].mxu0
    %v547 = vpop.f32.mrb[0].mxu0
    %v548 = vadd.f32 0.0, %v547
    %v549 = vpop.f32.mrb[0].mxu0
    %550 = vmatprep.mubr.bf16.mxu0 0
    %551 = vmatmul.mubr.bf16.gmra.mrb[0].mxu0 %v404
    %v552 = vpop.f32.mrb[0].mxu0
    %v553 = vadd.f32 0.0, %v552
    %v554 = vpop.f32.mrb[0].mxu0
    %v555 = vpop.f32.mrb[0].mxu0
    %v556 = vadd.f32 0.0, %v555
    %v557 = vpop.f32.mrb[0].mxu0
    %558 = vdwg.mxu0
    %559 = vst.msk [vmem:[#allocation2] sm:$0xff] %vm88, %v441
    %560 = vst.msk [vmem:[#allocation2 + $0x8] sm:$0xff] %vm88, %v444
    %561 = vst.msk [vmem:[#allocation2 + $0x10] sm:$0xff] %vm88, %v449
    %562 = vst.msk [vmem:[#allocation2 + $0x18] sm:$0xff] %vm88, %v452
    %563 = vst.msk [vmem:[#allocation2 + $0x20] sm:$0xff] %vm88, %v457
    %564 = vst.msk [vmem:[#allocation2 + $0x28] sm:$0xff] %vm88, %v460
    %565 = vst.msk [vmem:[#allocation2 + $0x30] sm:$0xff] %vm88, %v465
    %566 = vst.msk [vmem:[#allocation2 + $0x38] sm:$0xff] %vm88, %v468
    %567 = vst.msk [vmem:[#allocation2 + $0x40] sm:$0xff] %vm88, %v473
    %568 = vst.msk [vmem:[#allocation2 + $0x48] sm:$0xff] %vm88, %v476
    %569 = vst.msk [vmem:[#allocation2 + $0x50] sm:$0xff] %vm88, %v481
    %570 = vst.msk [vmem:[#allocation2 + $0x58] sm:$0xff] %vm88, %v484
    %571 = vst.msk [vmem:[#allocation2 + $0x60] sm:$0xff] %vm88, %v489
    %572 = vst.msk [vmem:[#allocation2 + $0x68] sm:$0xff] %vm88, %v492
    %573 = vst.msk [vmem:[#allocation2 + $0x70] sm:$0xff] %vm88, %v497
    %574 = vst.msk [vmem:[#allocation2 + $0x78] sm:$0xff] %vm88, %v500
    %575 = vst.msk [vmem:[#allocation2 + $0x80] sm:$0xff] %vm88, %v505
    %576 = vst.msk [vmem:[#allocation2 + $0x88] sm:$0xff] %vm88, %v508
    %577 = vst.msk [vmem:[#allocation2 + $0x90] sm:$0xff] %vm88, %v513
    %578 = vst.msk [vmem:[#allocation2 + $0x98] sm:$0xff] %vm88, %v516
    %579 = vst.msk [vmem:[#allocation2 + $0xa0] sm:$0xff] %vm88, %v521
    %580 = vst.msk [vmem:[#allocation2 + $0xa8] sm:$0xff] %vm88, %v524
    %581 = vst.msk [vmem:[#allocation2 + $0xb0] sm:$0xff] %vm88, %v529
    %582 = vst.msk [vmem:[#allocation2 + $0xb8] sm:$0xff] %vm88, %v532
    %583 = vst.msk [vmem:[#allocation2 + $0xc0] sm:$0xff] %vm88, %v537
    %584 = vst.msk [vmem:[#allocation2 + $0xc8] sm:$0xff] %vm88, %v540
    %585 = vst.msk [vmem:[#allocation2 + $0xd0] sm:$0xff] %vm88, %v545
    %586 = vst.msk [vmem:[#allocation2 + $0xd8] sm:$0xff] %vm88, %v548
    %587 = vst.msk [vmem:[#allocation2 + $0xe0] sm:$0xff] %vm88, %v553
    %588 = vst.msk [vmem:[#allocation2 + $0xe8] sm:$0xff] %vm88, %v556
    %v589 = vld [vmem:[%s2 + $0x8] sm:$0xf]
    %v590 = vld [vmem:[%s2 + $0x1c] sm:$0xf]
    %v591 = vld [vmem:[%s2 + $0x30] sm:$0xf]
    %v592 = vld [vmem:[%s2 + $0x44] sm:$0xf]
    %v593 = vld [vmem:[%s2 + $0x58] sm:$0xf]
    %v594 = vld [vmem:[%s2 + $0x6c] sm:$0xf]
    %v595 = vld [vmem:[%s2 + $0x80] sm:$0xf]
    %v596 = vld [vmem:[%s2 + $0x94] sm:$0xf]
    %v597 = vld [vmem:[#allocation3 + $0x2] sm:$0x1]
    %v598 = vld [vmem:[%s2 + $0xc] sm:$0xf]
    %v599 = vld [vmem:[%s2 + $0x20] sm:$0xf]
    %v600 = vld [vmem:[%s2 + $0x34] sm:$0xf]
    %v601 = vld [vmem:[%s2 + $0x48] sm:$0xf]
    %v602 = vld [vmem:[%s2 + $0x5c] sm:$0xf]
    %v603 = vld [vmem:[%s2 + $0x70] sm:$0xf]
    %v604 = vld [vmem:[%s2 + $0x84] sm:$0xf]
    %v605 = vld [vmem:[%s2 + $0x98] sm:$0xf]
    %v606 = vld [vmem:[#allocation3 + $0x3] sm:$0x1]
    %v607 = vpack.c.bf16 %v444, %v441
    %v608 = vpack.c.bf16 %v452, %v449
    %v609 = vpack.c.bf16 %v460, %v457
    %v610 = vpack.c.bf16 %v468, %v465
    %v611 = vpack.c.bf16 %v476, %v473
    %v612 = vpack.c.bf16 %v484, %v481
    %v613 = vpack.c.bf16 %v492, %v489
    %v614 = vpack.c.bf16 %v500, %v497
    %v615 = vpack.c.bf16 %v508, %v505
    %v616 = vpack.c.bf16 %v516, %v513
    %v617 = vpack.c.bf16 %v524, %v521
    %v618 = vpack.c.bf16 %v532, %v529
    %v619 = vpack.c.bf16 %v540, %v537
    %v620 = vpack.c.bf16 %v548, %v545
    %v621 = vpack.c.bf16 %v556, %v553
    %v622 = vlaneseq
    %v623 = vshrl.u32 %v622, 7
    %v624 = vsub.s32 0, %v623
    %v625 = vrot.slane %v597, %v624
    %v634 = vunpack.c.l.b16 %v589
    %v635 = vunpack.c.l.b16 %v590
    %v636 = vunpack.c.l.b16 %v591
    %v637 = vunpack.c.l.b16 %v592
    %v638 = vunpack.c.l.b16 %v593
    %v639 = vunpack.c.l.b16 %v594
    %v640 = vunpack.c.l.b16 %v595
    %v641 = vunpack.c.l.b16 %v596
    %v642 = vpack.c.b16 %v635, %v634
    %v643 = vpack.c.b16 %v637, %v636
    %v644 = vpack.c.b16 %v639, %v638
    %v645 = vpack.c.b16 %v641, %v640
    %v651 = vsel %vm88, %v607, 0
    %v654 = vsel %vm88, %v608, 0
    %v657 = vsel %vm88, %v609, 0
    %v660 = vsel %vm88, %v610, 0
    %v663 = vsel %vm88, %v611, 0
    %v666 = vsel %vm88, %v612, 0
    %v669 = vsel %vm88, %v613, 0
    %v672 = vsel %vm88, %v614, 0
    %v675 = vsel %vm88, %v615, 0
    %v678 = vsel %vm88, %v616, 0
    %v681 = vsel %vm88, %v617, 0
    %v684 = vsel %vm88, %v618, 0
    %v687 = vsel %vm88, %v619, 0
    %v690 = vsel %vm88, %v620, 0
    %v693 = vsel %vm88, %v621, 0
    %695 = vmatprep.subr.bf16.mxu0 0
    %696 = vmatpush1.bf16.msra.mxu0 %v642
    %697 = vmatprep.subr.bf16.mxu0 0
    %698 = vmatpush1.bf16.msra.mxu0 %v643
    %699 = vmatprep.subr.bf16.mxu0 0
    %700 = vmatpush1.bf16.msra.mxu0 %v644
    %701 = vmatprep.subr.bf16.mxu0 0
    %702 = vmatpush1.bf16.msra.mxu0 %v645
    %703 = vmatprep.subr.bf16.mxu0 0
    %704 = vmatpush1.bf16.msra.mxu0 0
    %705 = vmatprep.subr.bf16.mxu0 0
    %706 = vmatpush1.bf16.msra.mxu0 0
    %707 = vmatprep.subr.bf16.mxu0 0
    %708 = vmatpush1.bf16.msra.mxu0 0
    %709 = vmatprep.subr.bf16.mxu0 0
    %710 = vmatpush1.bf16.msra.mxu0 0
    %711 = vmatprep.subr.bf16.mxu0 0
    %712 = vmatpush1.bf16.msra.mxu0 0
    %713 = vmatprep.subr.bf16.mxu0 0
    %714 = vmatpush1.bf16.msra.mxu0 0
    %715 = vmatprep.subr.bf16.mxu0 0
    %716 = vmatpush1.bf16.msra.mxu0 0
    %717 = vmatprep.subr.bf16.mxu0 0
    %718 = vmatpush1.bf16.msra.mxu0 0
    %719 = vmatprep.subr.bf16.mxu0 0
    %720 = vmatpush1.bf16.msra.mxu0 0
    %721 = vmatprep.subr.bf16.mxu0 0
    %722 = vmatpush1.bf16.msra.mxu0 0
    %723 = vmatprep.subr.bf16.mxu0 0
    %724 = vmatpush1.bf16.msra.mxu0 0
    %725 = vmatprep.subr.bf16.mxu0 0
    %726 = vmatpush1.bf16.msra.mxu0 0
    %727 = vmatprep.mubr.bf16.mxu0 0
    %728 = vmatmul.mubr.bf16.gmra.mrb[0].mxu0 %v651
    %v729 = vpop.f32.mrb[0].mxu0
    %v730 = vadd.f32 %v625, %v729
    %v731 = vpop.f32.mrb[0].mxu0
    %v732 = vpop.f32.mrb[0].mxu0
    %v733 = vadd.f32 %v625, %v732
    %v734 = vpop.f32.mrb[0].mxu0
    %735 = vmatprep.mubr.bf16.mxu0 0
    %736 = vmatmul.mubr.bf16.gmra.mrb[0].mxu0 %v654
    %v737 = vpop.f32.mrb[0].mxu0
    %v738 = vadd.f32 %v625, %v737
    %v739 = vpop.f32.mrb[0].mxu0
    %v740 = vpop.f32.mrb[0].mxu0
    %v741 = vadd.f32 %v625, %v740
    %v742 = vpop.f32.mrb[0].mxu0
    %743 = vmatprep.mubr.bf16.mxu0 0
    %744 = vmatmul.mubr.bf16.gmra.mrb[0].mxu0 %v657
    %v745 = vpop.f32.mrb[0].mxu0
    %v746 = vadd.f32 %v625, %v745
    %v747 = vpop.f32.mrb[0].mxu0
    %v748 = vpop.f32.mrb[0].mxu0
    %v749 = vadd.f32 %v625, %v748
    %v750 = vpop.f32.mrb[0].mxu0
    %751 = vmatprep.mubr.bf16.mxu0 0
    %752 = vmatmul.mubr.bf16.gmra.mrb[0].mxu0 %v660
    %v753 = vpop.f32.mrb[0].mxu0
    %v754 = vadd.f32 %v625, %v753
    %v755 = vpop.f32.mrb[0].mxu0
    %v756 = vpop.f32.mrb[0].mxu0
    %v757 = vadd.f32 %v625, %v756
    %v758 = vpop.f32.mrb[0].mxu0
    %759 = vmatprep.mubr.bf16.mxu0 0
    %760 = vmatmul.mubr.bf16.gmra.mrb[0].mxu0 %v663
    %v761 = vpop.f32.mrb[0].mxu0
    %v762 = vadd.f32 %v625, %v761
    %v763 = vpop.f32.mrb[0].mxu0
    %v764 = vpop.f32.mrb[0].mxu0
    %v765 = vadd.f32 %v625, %v764
    %v766 = vpop.f32.mrb[0].mxu0
    %767 = vmatprep.mubr.bf16.mxu0 0
    %768 = vmatmul.mubr.bf16.gmra.mrb[0].mxu0 %v666
    %v769 = vpop.f32.mrb[0].mxu0
    %v770 = vadd.f32 %v625, %v769
    %v771 = vpop.f32.mrb[0].mxu0
    %v772 = vpop.f32.mrb[0].mxu0
    %v773 = vadd.f32 %v625, %v772
    %v774 = vpop.f32.mrb[0].mxu0
    %775 = vmatprep.mubr.bf16.mxu0 0
    %776 = vmatmul.mubr.bf16.gmra.mrb[0].mxu0 %v669
    %v777 = vpop.f32.mrb[0].mxu0
    %v778 = vadd.f32 %v625, %v777
    %v779 = vpop.f32.mrb[0].mxu0
    %v780 = vpop.f32.mrb[0].mxu0
    %v781 = vadd.f32 %v625, %v780
    %v782 = vpop.f32.mrb[0].mxu0
    %783 = vmatprep.mubr.bf16.mxu0 0
    %784 = vmatmul.mubr.bf16.gmra.mrb[0].mxu0 %v672
    %v785 = vpop.f32.mrb[0].mxu0
    %v786 = vadd.f32 %v625, %v785
    %v787 = vpop.f32.mrb[0].mxu0
    %v788 = vpop.f32.mrb[0].mxu0
    %v789 = vadd.f32 %v625, %v788
    %v790 = vpop.f32.mrb[0].mxu0
    %791 = vmatprep.mubr.bf16.mxu0 0
    %792 = vmatmul.mubr.bf16.gmra.mrb[0].mxu0 %v675
    %v793 = vpop.f32.mrb[0].mxu0
    %v794 = vadd.f32 %v625, %v793
    %v795 = vpop.f32.mrb[0].mxu0
    %v796 = vpop.f32.mrb[0].mxu0
    %v797 = vadd.f32 %v625, %v796
    %v798 = vpop.f32.mrb[0].mxu0
    %799 = vmatprep.mubr.bf16.mxu0 0
    %800 = vmatmul.mubr.bf16.gmra.mrb[0].mxu0 %v678
    %v801 = vpop.f32.mrb[0].mxu0
    %v802 = vadd.f32 %v625, %v801
    %v803 = vpop.f32.mrb[0].mxu0
    %v804 = vpop.f32.mrb[0].mxu0
    %v805 = vadd.f32 %v625, %v804
    %v806 = vpop.f32.mrb[0].mxu0
    %807 = vmatprep.mubr.bf16.mxu0 0
    %808 = vmatmul.mubr.bf16.gmra.mrb[0].mxu0 %v681
    %v809 = vpop.f32.mrb[0].mxu0
    %v810 = vadd.f32 %v625, %v809
    %v811 = vpop.f32.mrb[0].mxu0
    %v812 = vpop.f32.mrb[0].mxu0
    %v813 = vadd.f32 %v625, %v812
    %v814 = vpop.f32.mrb[0].mxu0
    %815 = vmatprep.mubr.bf16.mxu0 0
    %816 = vmatmul.mubr.bf16.gmra.mrb[0].mxu0 %v684
    %v817 = vpop.f32.mrb[0].mxu0
    %v818 = vadd.f32 %v625, %v817
    %v819 = vpop.f32.mrb[0].mxu0
    %v820 = vpop.f32.mrb[0].mxu0
    %v821 = vadd.f32 %v625, %v820
    %v822 = vpop.f32.mrb[0].mxu0
    %823 = vmatprep.mubr.bf16.mxu0 0
    %824 = vmatmul.mubr.bf16.gmra.mrb[0].mxu0 %v687
    %v825 = vpop.f32.mrb[0].mxu0
    %v826 = vadd.f32 %v625, %v825
    %v827 = vpop.f32.mrb[0].mxu0
    %v828 = vpop.f32.mrb[0].mxu0
    %v829 = vadd.f32 %v625, %v828
    %v830 = vpop.f32.mrb[0].mxu0
    %831 = vmatprep.mubr.bf16.mxu0 0
    %832 = vmatmul.mubr.bf16.gmra.mrb[0].mxu0 %v690
    %v833 = vpop.f32.mrb[0].mxu0
    %v834 = vadd.f32 %v625, %v833
    %v835 = vpop.f32.mrb[0].mxu0
    %v836 = vpop.f32.mrb[0].mxu0
    %v837 = vadd.f32 %v625, %v836
    %v838 = vpop.f32.mrb[0].mxu0
    %839 = vmatprep.mubr.bf16.mxu0 0
    %840 = vmatmul.mubr.bf16.gmra.mrb[0].mxu0 %v693
    %v841 = vpop.f32.mrb[0].mxu0
    %v842 = vadd.f32 %v625, %v841
    %v843 = vpop.f32.mrb[0].mxu0
    %v844 = vpop.f32.mrb[0].mxu0
    %v845 = vadd.f32 %v625, %v844
    %v846 = vpop.f32.mrb[0].mxu0
    %847 = vdwg.mxu0
    %v848 = vmax.f32 %v730, 0.0
    %v849 = vmax.f32 %v733, 0.0
    %v850 = vmax.f32 %v738, 0.0
    %v851 = vmax.f32 %v741, 0.0
    %v852 = vmax.f32 %v746, 0.0
    %v853 = vmax.f32 %v749, 0.0
    %v854 = vmax.f32 %v754, 0.0
    %v855 = vmax.f32 %v757, 0.0
    %v856 = vmax.f32 %v762, 0.0
    %v857 = vmax.f32 %v765, 0.0
    %v858 = vmax.f32 %v770, 0.0
    %v859 = vmax.f32 %v773, 0.0
    %v860 = vmax.f32 %v778, 0.0
    %v861 = vmax.f32 %v781, 0.0
    %v862 = vmax.f32 %v786, 0.0
    %v863 = vmax.f32 %v789, 0.0
    %v864 = vmax.f32 %v794, 0.0
    %v865 = vmax.f32 %v797, 0.0
    %v866 = vmax.f32 %v802, 0.0
    %v867 = vmax.f32 %v805, 0.0
    %v868 = vmax.f32 %v810, 0.0
    %v869 = vmax.f32 %v813, 0.0
    %v870 = vmax.f32 %v818, 0.0
    %v871 = vmax.f32 %v821, 0.0
    %v872 = vmax.f32 %v826, 0.0
    %v873 = vmax.f32 %v829, 0.0
    %v874 = vmax.f32 %v834, 0.0
    %v875 = vmax.f32 %v837, 0.0
    %v876 = vmax.f32 %v842, 0.0
    %v877 = vmax.f32 %v845, 0.0
    %v878 = vpack.c.bf16 %v849, %v848
    %v879 = vpack.c.bf16 %v851, %v850
    %v880 = vpack.c.bf16 %v853, %v852
    %v881 = vpack.c.bf16 %v855, %v854
    %v882 = vpack.c.bf16 %v857, %v856
    %v883 = vpack.c.bf16 %v859, %v858
    %v884 = vpack.c.bf16 %v861, %v860
    %v885 = vpack.c.bf16 %v863, %v862
    %v886 = vpack.c.bf16 %v865, %v864
    %v887 = vpack.c.bf16 %v867, %v866
    %v888 = vpack.c.bf16 %v869, %v868
    %v889 = vpack.c.bf16 %v871, %v870
    %v890 = vpack.c.bf16 %v873, %v872
    %v891 = vpack.c.bf16 %v875, %v874
    %v892 = vpack.c.bf16 %v877, %v876
    %v893 = vlaneseq
    %v894 = vshrl.u32 %v893, 7
    %v895 = vsub.s32 0, %v894
    %v896 = vrot.slane %v606, %v895
    %v905 = vunpack.c.l.b16 %v598
    %v906 = vunpack.c.l.b16 %v599
    %v907 = vunpack.c.l.b16 %v600
    %v908 = vunpack.c.l.b16 %v601
    %v909 = vunpack.c.l.b16 %v602
    %v910 = vunpack.c.l.b16 %v603
    %v911 = vunpack.c.l.b16 %v604
    %v912 = vunpack.c.l.b16 %v605
    %v913 = vpack.c.b16 %v906, %v905
    %v914 = vpack.c.b16 %v908, %v907
    %v915 = vpack.c.b16 %v910, %v909
    %v916 = vpack.c.b16 %v912, %v911
    %v922 = vsel %vm88, %v878, 0
    %v925 = vsel %vm88, %v879, 0
    %v928 = vsel %vm88, %v880, 0
    %v931 = vsel %vm88, %v881, 0
    %v934 = vsel %vm88, %v882, 0
    %v937 = vsel %vm88, %v883, 0
    %v940 = vsel %vm88, %v884, 0
    %v943 = vsel %vm88, %v885, 0
    %v946 = vsel %vm88, %v886, 0
    %v949 = vsel %vm88, %v887, 0
    %v952 = vsel %vm88, %v888, 0
    %v955 = vsel %vm88, %v889, 0
    %v958 = vsel %vm88, %v890, 0
    %v961 = vsel %vm88, %v891, 0
    %v964 = vsel %vm88, %v892, 0
    %966 = vmatprep.subr.bf16.mxu0 0
    %967 = vmatpush1.bf16.msra.mxu0 %v913
    %968 = vmatprep.subr.bf16.mxu0 0
    %969 = vmatpush1.bf16.msra.mxu0 %v914
    %970 = vmatprep.subr.bf16.mxu0 0
    %971 = vmatpush1.bf16.msra.mxu0 %v915
    %972 = vmatprep.subr.bf16.mxu0 0
    %973 = vmatpush1.bf16.msra.mxu0 %v916
    %974 = vmatprep.subr.bf16.mxu0 0
    %975 = vmatpush1.bf16.msra.mxu0 0
    %976 = vmatprep.subr.bf16.mxu0 0
    %977 = vmatpush1.bf16.msra.mxu0 0
    %978 = vmatprep.subr.bf16.mxu0 0
    %979 = vmatpush1.bf16.msra.mxu0 0
    %980 = vmatprep.subr.bf16.mxu0 0
    %981 = vmatpush1.bf16.msra.mxu0 0
    %982 = vmatprep.subr.bf16.mxu0 0
    %983 = vmatpush1.bf16.msra.mxu0 0
    %984 = vmatprep.subr.bf16.mxu0 0
    %985 = vmatpush1.bf16.msra.mxu0 0
    %986 = vmatprep.subr.bf16.mxu0 0
    %987 = vmatpush1.bf16.msra.mxu0 0
    %988 = vmatprep.subr.bf16.mxu0 0
    %989 = vmatpush1.bf16.msra.mxu0 0
    %990 = vmatprep.subr.bf16.mxu0 0
    %991 = vmatpush1.bf16.msra.mxu0 0
    %992 = vmatprep.subr.bf16.mxu0 0
    %993 = vmatpush1.bf16.msra.mxu0 0
    %994 = vmatprep.subr.bf16.mxu0 0
    %995 = vmatpush1.bf16.msra.mxu0 0
    %996 = vmatprep.subr.bf16.mxu0 0
    %997 = vmatpush1.bf16.msra.mxu0 0
    %998 = vmatprep.mubr.bf16.mxu0 0
    %999 = vmatmul.mubr.bf16.gmra.mrb[0].mxu0 %v922
    %v1000 = vpop.f32.mrb[0].mxu0
    %v1001 = vadd.f32 %v896, %v1000
    %v1002 = vpop.f32.mrb[0].mxu0
    %v1003 = vpop.f32.mrb[0].mxu0
    %v1004 = vadd.f32 %v896, %v1003
    %v1005 = vpop.f32.mrb[0].mxu0
    %1006 = vmatprep.mubr.bf16.mxu0 0
    %1007 = vmatmul.mubr.bf16.gmra.mrb[0].mxu0 %v925
    %v1008 = vpop.f32.mrb[0].mxu0
    %v1009 = vadd.f32 %v896, %v1008
    %v1010 = vpop.f32.mrb[0].mxu0
    %v1011 = vpop.f32.mrb[0].mxu0
    %v1012 = vadd.f32 %v896, %v1011
    %v1013 = vpop.f32.mrb[0].mxu0
    %1014 = vmatprep.mubr.bf16.mxu0 0
    %1015 = vmatmul.mubr.bf16.gmra.mrb[0].mxu0 %v928
    %v1016 = vpop.f32.mrb[0].mxu0
    %v1017 = vadd.f32 %v896, %v1016
    %v1018 = vpop.f32.mrb[0].mxu0
    %v1019 = vpop.f32.mrb[0].mxu0
    %v1020 = vadd.f32 %v896, %v1019
    %v1021 = vpop.f32.mrb[0].mxu0
    %1022 = vmatprep.mubr.bf16.mxu0 0
    %1023 = vmatmul.mubr.bf16.gmra.mrb[0].mxu0 %v931
    %v1024 = vpop.f32.mrb[0].mxu0
    %v1025 = vadd.f32 %v896, %v1024
    %v1026 = vpop.f32.mrb[0].mxu0
    %v1027 = vpop.f32.mrb[0].mxu0
    %v1028 = vadd.f32 %v896, %v1027
    %v1029 = vpop.f32.mrb[0].mxu0
    %1030 = vmatprep.mubr.bf16.mxu0 0
    %1031 = vmatmul.mubr.bf16.gmra.mrb[0].mxu0 %v934
    %v1032 = vpop.f32.mrb[0].mxu0
    %v1033 = vadd.f32 %v896, %v1032
    %v1034 = vpop.f32.mrb[0].mxu0
    %v1035 = vpop.f32.mrb[0].mxu0
    %v1036 = vadd.f32 %v896, %v1035
    %v1037 = vpop.f32.mrb[0].mxu0
    %1038 = vmatprep.mubr.bf16.mxu0 0
    %1039 = vmatmul.mubr.bf16.gmra.mrb[0].mxu0 %v937
    %v1040 = vpop.f32.mrb[0].mxu0
    %v1041 = vadd.f32 %v896, %v1040
    %v1042 = vpop.f32.mrb[0].mxu0
    %v1043 = vpop.f32.mrb[0].mxu0
    %v1044 = vadd.f32 %v896, %v1043
    %v1045 = vpop.f32.mrb[0].mxu0
    %1046 = vmatprep.mubr.bf16.mxu0 0
    %1047 = vmatmul.mubr.bf16.gmra.mrb[0].mxu0 %v940
    %v1048 = vpop.f32.mrb[0].mxu0
    %v1049 = vadd.f32 %v896, %v1048
    %v1050 = vpop.f32.mrb[0].mxu0
    %v1051 = vpop.f32.mrb[0].mxu0
    %v1052 = vadd.f32 %v896, %v1051
    %v1053 = vpop.f32.mrb[0].mxu0
    %1054 = vmatprep.mubr.bf16.mxu0 0
    %1055 = vmatmul.mubr.bf16.gmra.mrb[0].mxu0 %v943
    %v1056 = vpop.f32.mrb[0].mxu0
    %v1057 = vadd.f32 %v896, %v1056
    %v1058 = vpop.f32.mrb[0].mxu0
    %v1059 = vpop.f32.mrb[0].mxu0
    %v1060 = vadd.f32 %v896, %v1059
    %v1061 = vpop.f32.mrb[0].mxu0
    %1062 = vmatprep.mubr.bf16.mxu0 0
    %1063 = vmatmul.mubr.bf16.gmra.mrb[0].mxu0 %v946
    %v1064 = vpop.f32.mrb[0].mxu0
    %v1065 = vadd.f32 %v896, %v1064
    %v1066 = vpop.f32.mrb[0].mxu0
    %v1067 = vpop.f32.mrb[0].mxu0
    %v1068 = vadd.f32 %v896, %v1067
    %v1069 = vpop.f32.mrb[0].mxu0
    %1070 = vmatprep.mubr.bf16.mxu0 0
    %1071 = vmatmul.mubr.bf16.gmra.mrb[0].mxu0 %v949
    %v1072 = vpop.f32.mrb[0].mxu0
    %v1073 = vadd.f32 %v896, %v1072
    %v1074 = vpop.f32.mrb[0].mxu0
    %v1075 = vpop.f32.mrb[0].mxu0
    %v1076 = vadd.f32 %v896, %v1075
    %v1077 = vpop.f32.mrb[0].mxu0
    %1078 = vmatprep.mubr.bf16.mxu0 0
    %1079 = vmatmul.mubr.bf16.gmra.mrb[0].mxu0 %v952
    %v1080 = vpop.f32.mrb[0].mxu0
    %v1081 = vadd.f32 %v896, %v1080
    %v1082 = vpop.f32.mrb[0].mxu0
    %v1083 = vpop.f32.mrb[0].mxu0
    %v1084 = vadd.f32 %v896, %v1083
    %v1085 = vpop.f32.mrb[0].mxu0
    %1086 = vmatprep.mubr.bf16.mxu0 0
    %1087 = vmatmul.mubr.bf16.gmra.mrb[0].mxu0 %v955
    %v1088 = vpop.f32.mrb[0].mxu0
    %v1089 = vadd.f32 %v896, %v1088
    %v1090 = vpop.f32.mrb[0].mxu0
    %v1091 = vpop.f32.mrb[0].mxu0
    %v1092 = vadd.f32 %v896, %v1091
    %v1093 = vpop.f32.mrb[0].mxu0
    %1094 = vmatprep.mubr.bf16.mxu0 0
    %1095 = vmatmul.mubr.bf16.gmra.mrb[0].mxu0 %v958
    %v1096 = vpop.f32.mrb[0].mxu0
    %v1097 = vadd.f32 %v896, %v1096
    %v1098 = vpop.f32.mrb[0].mxu0
    %v1099 = vpop.f32.mrb[0].mxu0
    %v1100 = vadd.f32 %v896, %v1099
    %v1101 = vpop.f32.mrb[0].mxu0
    %1102 = vmatprep.mubr.bf16.mxu0 0
    %1103 = vmatmul.mubr.bf16.gmra.mrb[0].mxu0 %v961
    %v1104 = vpop.f32.mrb[0].mxu0
    %v1105 = vadd.f32 %v896, %v1104
    %v1106 = vpop.f32.mrb[0].mxu0
    %v1107 = vpop.f32.mrb[0].mxu0
    %v1108 = vadd.f32 %v896, %v1107
    %v1109 = vpop.f32.mrb[0].mxu0
    %1110 = vmatprep.mubr.bf16.mxu0 0
    %1111 = vmatmul.mubr.bf16.gmra.mrb[0].mxu0 %v964
    %v1112 = vpop.f32.mrb[0].mxu0
    %v1113 = vadd.f32 %v896, %v1112
    %v1114 = vpop.f32.mrb[0].mxu0
    %v1115 = vpop.f32.mrb[0].mxu0
    %v1116 = vadd.f32 %v896, %v1115
    %v1117 = vpop.f32.mrb[0].mxu0
    %1118 = vdwg.mxu0
    %v1119 = vld [vmem:[#allocation3 + $0x4] sm:$0x1]
    %v1120 = vld [vmem:[#allocation3 + $0x5] sm:$0x1]
    %v1121 = vsel %vm88, %v1001, 0.0
    %1122 = vadd.xlane.f32.xlu0 %v1121
    %v1123 = vpop.xlane.xlu0 %1122
    %v1124 = vsel %vm88, %v1004, 0.0
    %1125 = vadd.xlane.f32.xlu0 %v1124
    %v1126 = vpop.xlane.xlu0 %1125
    %v1127 = vsel %vm88, %v1009, 0.0
    %1128 = vadd.xlane.f32.xlu0 %v1127
    %v1129 = vpop.xlane.xlu0 %1128
    %v1130 = vsel %vm88, %v1012, 0.0
    %1131 = vadd.xlane.f32.xlu0 %v1130
    %v1132 = vpop.xlane.xlu0 %1131
    %v1133 = vsel %vm88, %v1017, 0.0
    %1134 = vadd.xlane.f32.xlu0 %v1133
    %v1135 = vpop.xlane.xlu0 %1134
    %v1136 = vsel %vm88, %v1020, 0.0
    %1137 = vadd.xlane.f32.xlu0 %v1136
    %v1138 = vpop.xlane.xlu0 %1137
    %v1139 = vsel %vm88, %v1025, 0.0
    %1140 = vadd.xlane.f32.xlu0 %v1139
    %v1141 = vpop.xlane.xlu0 %1140
    %v1142 = vsel %vm88, %v1028, 0.0
    %1143 = vadd.xlane.f32.xlu0 %v1142
    %v1144 = vpop.xlane.xlu0 %1143
    %v1145 = vsel %vm88, %v1033, 0.0
    %1146 = vadd.xlane.f32.xlu0 %v1145
    %v1147 = vpop.xlane.xlu0 %1146
    %v1148 = vsel %vm88, %v1036, 0.0
    %1149 = vadd.xlane.f32.xlu0 %v1148
    %v1150 = vpop.xlane.xlu0 %1149
    %v1151 = vsel %vm88, %v1041, 0.0
    %1152 = vadd.xlane.f32.xlu0 %v1151
    %v1153 = vpop.xlane.xlu0 %1152
    %v1154 = vsel %vm88, %v1044, 0.0
    %1155 = vadd.xlane.f32.xlu0 %v1154
    %v1156 = vpop.xlane.xlu0 %1155
    %v1157 = vsel %vm88, %v1049, 0.0
    %1158 = vadd.xlane.f32.xlu0 %v1157
    %v1159 = vpop.xlane.xlu0 %1158
    %v1160 = vsel %vm88, %v1052, 0.0
    %1161 = vadd.xlane.f32.xlu0 %v1160
    %v1162 = vpop.xlane.xlu0 %1161
    %v1163 = vsel %vm88, %v1057, 0.0
    %1164 = vadd.xlane.f32.xlu0 %v1163
    %v1165 = vpop.xlane.xlu0 %1164
    %v1166 = vsel %vm88, %v1060, 0.0
    %1167 = vadd.xlane.f32.xlu0 %v1166
    %v1168 = vpop.xlane.xlu0 %1167
    %v1169 = vsel %vm88, %v1065, 0.0
    %1170 = vadd.xlane.f32.xlu0 %v1169
    %v1171 = vpop.xlane.xlu0 %1170
    %v1172 = vsel %vm88, %v1068, 0.0
    %1173 = vadd.xlane.f32.xlu0 %v1172
    %v1174 = vpop.xlane.xlu0 %1173
    %v1175 = vsel %vm88, %v1073, 0.0
    %1176 = vadd.xlane.f32.xlu0 %v1175
    %v1177 = vpop.xlane.xlu0 %1176
    %v1178 = vsel %vm88, %v1076, 0.0
    %1179 = vadd.xlane.f32.xlu0 %v1178
    %v1180 = vpop.xlane.xlu0 %1179
    %v1181 = vsel %vm88, %v1081, 0.0
    %1182 = vadd.xlane.f32.xlu0 %v1181
    %v1183 = vpop.xlane.xlu0 %1182
    %v1184 = vsel %vm88, %v1084, 0.0
    %1185 = vadd.xlane.f32.xlu0 %v1184
    %v1186 = vpop.xlane.xlu0 %1185
    %v1187 = vsel %vm88, %v1089, 0.0
    %1188 = vadd.xlane.f32.xlu0 %v1187
    %v1189 = vpop.xlane.xlu0 %1188
    %v1190 = vsel %vm88, %v1092, 0.0
    %1191 = vadd.xlane.f32.xlu0 %v1190
    %v1192 = vpop.xlane.xlu0 %1191
    %v1193 = vsel %vm88, %v1097, 0.0
    %1194 = vadd.xlane.f32.xlu0 %v1193
    %v1195 = vpop.xlane.xlu0 %1194
    %v1196 = vsel %vm88, %v1100, 0.0
    %1197 = vadd.xlane.f32.xlu0 %v1196
    %v1198 = vpop.xlane.xlu0 %1197
    %v1199 = vsel %vm88, %v1105, 0.0
    %1200 = vadd.xlane.f32.xlu0 %v1199
    %v1201 = vpop.xlane.xlu0 %1200
    %v1202 = vsel %vm88, %v1108, 0.0
    %1203 = vadd.xlane.f32.xlu0 %v1202
    %v1204 = vpop.xlane.xlu0 %1203
    %v1205 = vsel %vm88, %v1113, 0.0
    %1206 = vadd.xlane.f32.xlu0 %v1205
    %v1207 = vpop.xlane.xlu0 %1206
    %v1208 = vsel %vm88, %v1116, 0.0
    %1209 = vadd.xlane.f32.xlu0 %v1208
    %v1210 = vpop.xlane.xlu0 %1209
    %v1211 = vrcp.pop 64.0
    %v1212 = vmul.f32 %v1123, %v1211
    %v1213 = vmul.f32 %v1126, %v1211
    %v1214 = vmul.f32 %v1129, %v1211
    %v1215 = vmul.f32 %v1132, %v1211
    %v1216 = vmul.f32 %v1135, %v1211
    %v1217 = vmul.f32 %v1138, %v1211
    %v1218 = vmul.f32 %v1141, %v1211
    %v1219 = vmul.f32 %v1144, %v1211
    %v1220 = vmul.f32 %v1147, %v1211
    %v1221 = vmul.f32 %v1150, %v1211
    %v1222 = vmul.f32 %v1153, %v1211
    %v1223 = vmul.f32 %v1156, %v1211
    %v1224 = vmul.f32 %v1159, %v1211
    %v1225 = vmul.f32 %v1162, %v1211
    %v1226 = vmul.f32 %v1165, %v1211
    %v1227 = vmul.f32 %v1168, %v1211
    %v1228 = vmul.f32 %v1171, %v1211
    %v1229 = vmul.f32 %v1174, %v1211
    %v1230 = vmul.f32 %v1177, %v1211
    %v1231 = vmul.f32 %v1180, %v1211
    %v1232 = vmul.f32 %v1183, %v1211
    %v1233 = vmul.f32 %v1186, %v1211
    %v1234 = vmul.f32 %v1189, %v1211
    %v1235 = vmul.f32 %v1192, %v1211
    %v1236 = vmul.f32 %v1195, %v1211
    %v1237 = vmul.f32 %v1198, %v1211
    %v1238 = vmul.f32 %v1201, %v1211
    %v1239 = vmul.f32 %v1204, %v1211
    %v1240 = vmul.f32 %v1207, %v1211
    %v1241 = vmul.f32 %v1210, %v1211
    %v1242 = vsub.f32 %v1001, %v1212
    %v1243 = vsub.f32 %v1004, %v1213
    %v1244 = vsub.f32 %v1009, %v1214
    %v1245 = vsub.f32 %v1012, %v1215
    %v1246 = vsub.f32 %v1017, %v1216
    %v1247 = vsub.f32 %v1020, %v1217
    %v1248 = vsub.f32 %v1025, %v1218
    %v1249 = vsub.f32 %v1028, %v1219
    %v1250 = vsub.f32 %v1033, %v1220
    %v1251 = vsub.f32 %v1036, %v1221
    %v1252 = vsub.f32 %v1041, %v1222
    %v1253 = vsub.f32 %v1044, %v1223
    %v1254 = vsub.f32 %v1049, %v1224
    %v1255 = vsub.f32 %v1052, %v1225
    %v1256 = vsub.f32 %v1057, %v1226
    %v1257 = vsub.f32 %v1060, %v1227
    %v1258 = vsub.f32 %v1065, %v1228
    %v1259 = vsub.f32 %v1068, %v1229
    %v1260 = vsub.f32 %v1073, %v1230
    %v1261 = vsub.f32 %v1076, %v1231
    %v1262 = vsub.f32 %v1081, %v1232
    %v1263 = vsub.f32 %v1084, %v1233
    %v1264 = vsub.f32 %v1089, %v1234
    %v1265 = vsub.f32 %v1092, %v1235
    %v1266 = vsub.f32 %v1097, %v1236
    %v1267 = vsub.f32 %v1100, %v1237
    %v1268 = vsub.f32 %v1105, %v1238
    %v1269 = vsub.f32 %v1108, %v1239
    %v1270 = vsub.f32 %v1113, %v1240
    %v1271 = vsub.f32 %v1116, %v1241
    %v1272 = vmul.f32 %v1242, %v1242
    %v1273 = vmul.f32 %v1243, %v1243
    %v1274 = vmul.f32 %v1244, %v1244
    %v1275 = vmul.f32 %v1245, %v1245
    %v1276 = vmul.f32 %v1246, %v1246
    %v1277 = vmul.f32 %v1247, %v1247
    %v1278 = vmul.f32 %v1248, %v1248
    %v1279 = vmul.f32 %v1249, %v1249
    %v1280 = vmul.f32 %v1250, %v1250
    %v1281 = vmul.f32 %v1251, %v1251
    %v1282 = vmul.f32 %v1252, %v1252
    %v1283 = vmul.f32 %v1253, %v1253
    %v1284 = vmul.f32 %v1254, %v1254
    %v1285 = vmul.f32 %v1255, %v1255
    %v1286 = vmul.f32 %v1256, %v1256
    %v1287 = vmul.f32 %v1257, %v1257
    %v1288 = vmul.f32 %v1258, %v1258
    %v1289 = vmul.f32 %v1259, %v1259
    %v1290 = vmul.f32 %v1260, %v1260
    %v1291 = vmul.f32 %v1261, %v1261
    %v1292 = vmul.f32 %v1262, %v1262
    %v1293 = vmul.f32 %v1263, %v1263
    %v1294 = vmul.f32 %v1264, %v1264
    %v1295 = vmul.f32 %v1265, %v1265
    %v1296 = vmul.f32 %v1266, %v1266
    %v1297 = vmul.f32 %v1267, %v1267
    %v1298 = vmul.f32 %v1268, %v1268
    %v1299 = vmul.f32 %v1269, %v1269
    %v1300 = vmul.f32 %v1270, %v1270
    %v1301 = vmul.f32 %v1271, %v1271
    %v1302 = vsel %vm88, %v1272, 0.0
    %1303 = vadd.xlane.f32.xlu0 %v1302
    %v1304 = vpop.xlane.xlu0 %1303
    %v1305 = vsel %vm88, %v1273, 0.0
    %1306 = vadd.xlane.f32.xlu0 %v1305
    %v1307 = vpop.xlane.xlu0 %1306
    %v1308 = vsel %vm88, %v1274, 0.0
    %1309 = vadd.xlane.f32.xlu0 %v1308
    %v1310 = vpop.xlane.xlu0 %1309
    %v1311 = vsel %vm88, %v1275, 0.0
    %1312 = vadd.xlane.f32.xlu0 %v1311
    %v1313 = vpop.xlane.xlu0 %1312
    %v1314 = vsel %vm88, %v1276, 0.0
    %1315 = vadd.xlane.f32.xlu0 %v1314
    %v1316 = vpop.xlane.xlu0 %1315
    %v1317 = vsel %vm88, %v1277, 0.0
    %1318 = vadd.xlane.f32.xlu0 %v1317
    %v1319 = vpop.xlane.xlu0 %1318
    %v1320 = vsel %vm88, %v1278, 0.0
    %1321 = vadd.xlane.f32.xlu0 %v1320
    %v1322 = vpop.xlane.xlu0 %1321
    %v1323 = vsel %vm88, %v1279, 0.0
    %1324 = vadd.xlane.f32.xlu0 %v1323
    %v1325 = vpop.xlane.xlu0 %1324
    %v1326 = vsel %vm88, %v1280, 0.0
    %1327 = vadd.xlane.f32.xlu0 %v1326
    %v1328 = vpop.xlane.xlu0 %1327
    %v1329 = vsel %vm88, %v1281, 0.0
    %1330 = vadd.xlane.f32.xlu0 %v1329
    %v1331 = vpop.xlane.xlu0 %1330
    %v1332 = vsel %vm88, %v1282, 0.0
    %1333 = vadd.xlane.f32.xlu0 %v1332
    %v1334 = vpop.xlane.xlu0 %1333
    %v1335 = vsel %vm88, %v1283, 0.0
    %1336 = vadd.xlane.f32.xlu0 %v1335
    %v1337 = vpop.xlane.xlu0 %1336
    %v1338 = vsel %vm88, %v1284, 0.0
    %1339 = vadd.xlane.f32.xlu0 %v1338
    %v1340 = vpop.xlane.xlu0 %1339
    %v1341 = vsel %vm88, %v1285, 0.0
    %1342 = vadd.xlane.f32.xlu0 %v1341
    %v1343 = vpop.xlane.xlu0 %1342
    %v1344 = vsel %vm88, %v1286, 0.0
    %1345 = vadd.xlane.f32.xlu0 %v1344
    %v1346 = vpop.xlane.xlu0 %1345
    %v1347 = vsel %vm88, %v1287, 0.0
    %1348 = vadd.xlane.f32.xlu0 %v1347
    %v1349 = vpop.xlane.xlu0 %1348
    %v1350 = vsel %vm88, %v1288, 0.0
    %1351 = vadd.xlane.f32.xlu0 %v1350
    %v1352 = vpop.xlane.xlu0 %1351
    %v1353 = vsel %vm88, %v1289, 0.0
    %1354 = vadd.xlane.f32.xlu0 %v1353
    %v1355 = vpop.xlane.xlu0 %1354
    %v1356 = vsel %vm88, %v1290, 0.0
    %1357 = vadd.xlane.f32.xlu0 %v1356
    %v1358 = vpop.xlane.xlu0 %1357
    %v1359 = vsel %vm88, %v1291, 0.0
    %1360 = vadd.xlane.f32.xlu0 %v1359
    %v1361 = vpop.xlane.xlu0 %1360
    %v1362 = vsel %vm88, %v1292, 0.0
    %1363 = vadd.xlane.f32.xlu0 %v1362
    %v1364 = vpop.xlane.xlu0 %1363
    %v1365 = vsel %vm88, %v1293, 0.0
    %1366 = vadd.xlane.f32.xlu0 %v1365
    %v1367 = vpop.xlane.xlu0 %1366
    %v1368 = vsel %vm88, %v1294, 0.0
    %1369 = vadd.xlane.f32.xlu0 %v1368
    %v1370 = vpop.xlane.xlu0 %1369
    %v1371 = vsel %vm88, %v1295, 0.0
    %1372 = vadd.xlane.f32.xlu0 %v1371
    %v1373 = vpop.xlane.xlu0 %1372
    %v1374 = vsel %vm88, %v1296, 0.0
    %1375 = vadd.xlane.f32.xlu0 %v1374
    %v1376 = vpop.xlane.xlu0 %1375
    %v1377 = vsel %vm88, %v1297, 0.0
    %1378 = vadd.xlane.f32.xlu0 %v1377
    %v1379 = vpop.xlane.xlu0 %1378
    %v1380 = vsel %vm88, %v1298, 0.0
    %1381 = vadd.xlane.f32.xlu0 %v1380
    %v1382 = vpop.xlane.xlu0 %1381
    %v1383 = vsel %vm88, %v1299, 0.0
    %1384 = vadd.xlane.f32.xlu0 %v1383
    %v1385 = vpop.xlane.xlu0 %1384
    %v1386 = vsel %vm88, %v1300, 0.0
    %1387 = vadd.xlane.f32.xlu0 %v1386
    %v1388 = vpop.xlane.xlu0 %1387
    %v1389 = vsel %vm88, %v1301, 0.0
    %1390 = vadd.xlane.f32.xlu0 %v1389
    %v1391 = vpop.xlane.xlu0 %1390
    %v1392 = vmul.f32 %v1304, %v1211
    %v1393 = vmul.f32 %v1307, %v1211
    %v1394 = vmul.f32 %v1310, %v1211
    %v1395 = vmul.f32 %v1313, %v1211
    %v1396 = vmul.f32 %v1316, %v1211
    %v1397 = vmul.f32 %v1319, %v1211
    %v1398 = vmul.f32 %v1322, %v1211
    %v1399 = vmul.f32 %v1325, %v1211
    %v1400 = vmul.f32 %v1328, %v1211
    %v1401 = vmul.f32 %v1331, %v1211
    %v1402 = vmul.f32 %v1334, %v1211
    %v1403 = vmul.f32 %v1337, %v1211
    %v1404 = vmul.f32 %v1340, %v1211
    %v1405 = vmul.f32 %v1343, %v1211
    %v1406 = vmul.f32 %v1346, %v1211
    %v1407 = vmul.f32 %v1349, %v1211
    %v1408 = vmul.f32 %v1352, %v1211
    %v1409 = vmul.f32 %v1355, %v1211
    %v1410 = vmul.f32 %v1358, %v1211
    %v1411 = vmul.f32 %v1361, %v1211
    %v1412 = vmul.f32 %v1364, %v1211
    %v1413 = vmul.f32 %v1367, %v1211
    %v1414 = vmul.f32 %v1370, %v1211
    %v1415 = vmul.f32 %v1373, %v1211
    %v1416 = vmul.f32 %v1376, %v1211
    %v1417 = vmul.f32 %v1379, %v1211
    %v1418 = vmul.f32 %v1382, %v1211
    %v1419 = vmul.f32 %v1385, %v1211
    %v1420 = vmul.f32 %v1388, %v1211
    %v1421 = vmul.f32 %v1391, %v1211
    %v1422 = vadd.f32 %v1392, 1e-05
    %v1423 = vadd.f32 %v1393, 1e-05
    %v1424 = vadd.f32 %v1394, 1e-05
    %v1425 = vadd.f32 %v1395, 1e-05
    %v1426 = vadd.f32 %v1396, 1e-05
    %v1427 = vadd.f32 %v1397, 1e-05
    %v1428 = vadd.f32 %v1398, 1e-05
    %v1429 = vadd.f32 %v1399, 1e-05
    %v1430 = vadd.f32 %v1400, 1e-05
    %v1431 = vadd.f32 %v1401, 1e-05
    %v1432 = vadd.f32 %v1402, 1e-05
    %v1433 = vadd.f32 %v1403, 1e-05
    %v1434 = vadd.f32 %v1404, 1e-05
    %v1435 = vadd.f32 %v1405, 1e-05
    %v1436 = vadd.f32 %v1406, 1e-05
    %v1437 = vadd.f32 %v1407, 1e-05
    %v1438 = vadd.f32 %v1408, 1e-05
    %v1439 = vadd.f32 %v1409, 1e-05
    %v1440 = vadd.f32 %v1410, 1e-05
    %v1441 = vadd.f32 %v1411, 1e-05
    %v1442 = vadd.f32 %v1412, 1e-05
    %v1443 = vadd.f32 %v1413, 1e-05
    %v1444 = vadd.f32 %v1414, 1e-05
    %v1445 = vadd.f32 %v1415, 1e-05
    %v1446 = vadd.f32 %v1416, 1e-05
    %v1447 = vadd.f32 %v1417, 1e-05
    %v1448 = vadd.f32 %v1418, 1e-05
    %v1449 = vadd.f32 %v1419, 1e-05
    %v1450 = vadd.f32 %v1420, 1e-05
    %v1451 = vadd.f32 %v1421, 1e-05
    %v1452 = vrsqrt.pop %v1422
    %v1453 = vrsqrt.pop %v1423
    %v1454 = vrsqrt.pop %v1424
    %v1455 = vrsqrt.pop %v1425
    %v1456 = vrsqrt.pop %v1426
    %v1457 = vrsqrt.pop %v1427
    %v1458 = vrsqrt.pop %v1428
    %v1459 = vrsqrt.pop %v1429
    %v1460 = vrsqrt.pop %v1430
    %v1461 = vrsqrt.pop %v1431
    %v1462 = vrsqrt.pop %v1432
    %v1463 = vrsqrt.pop %v1433
    %v1464 = vrsqrt.pop %v1434
    %v1465 = vrsqrt.pop %v1435
    %v1466 = vrsqrt.pop %v1436
    %v1467 = vrsqrt.pop %v1437
    %v1468 = vrsqrt.pop %v1438
    %v1469 = vrsqrt.pop %v1439
    %v1470 = vrsqrt.pop %v1440
    %v1471 = vrsqrt.pop %v1441
    %v1472 = vrsqrt.pop %v1442
    %v1473 = vrsqrt.pop %v1443
    %v1474 = vrsqrt.pop %v1444
    %v1475 = vrsqrt.pop %v1445
    %v1476 = vrsqrt.pop %v1446
    %v1477 = vrsqrt.pop %v1447
    %v1478 = vrsqrt.pop %v1448
    %v1479 = vrsqrt.pop %v1449
    %v1480 = vrsqrt.pop %v1450
    %v1481 = vrsqrt.pop %v1451
    %v1482 = vmul.f32 %v1242, %v1452
    %v1483 = vmul.f32 %v1243, %v1453
    %v1484 = vmul.f32 %v1244, %v1454
    %v1485 = vmul.f32 %v1245, %v1455
    %v1486 = vmul.f32 %v1246, %v1456
    %v1487 = vmul.f32 %v1247, %v1457
    %v1488 = vmul.f32 %v1248, %v1458
    %v1489 = vmul.f32 %v1249, %v1459
    %v1490 = vmul.f32 %v1250, %v1460
    %v1491 = vmul.f32 %v1251, %v1461
    %v1492 = vmul.f32 %v1252, %v1462
    %v1493 = vmul.f32 %v1253, %v1463
    %v1494 = vmul.f32 %v1254, %v1464
    %v1495 = vmul.f32 %v1255, %v1465
    %v1496 = vmul.f32 %v1256, %v1466
    %v1497 = vmul.f32 %v1257, %v1467
    %v1498 = vmul.f32 %v1258, %v1468
    %v1499 = vmul.f32 %v1259, %v1469
    %v1500 = vmul.f32 %v1260, %v1470
    %v1501 = vmul.f32 %v1261, %v1471
    %v1502 = vmul.f32 %v1262, %v1472
    %v1503 = vmul.f32 %v1263, %v1473
    %v1504 = vmul.f32 %v1264, %v1474
    %v1505 = vmul.f32 %v1265, %v1475
    %v1506 = vmul.f32 %v1266, %v1476
    %v1507 = vmul.f32 %v1267, %v1477
    %v1508 = vmul.f32 %v1268, %v1478
    %v1509 = vmul.f32 %v1269, %v1479
    %v1510 = vmul.f32 %v1270, %v1480
    %v1511 = vmul.f32 %v1271, %v1481
    %v1512 = vlaneseq
    %v1513 = vshrl.u32 %v1512, 7
    %v1514 = vsub.s32 0, %v1513
    %v1515 = vrot.slane %v1119, %v1514
    %v1516 = vmul.f32 %v1482, %v1515
    %v1517 = vmul.f32 %v1483, %v1515
    %v1518 = vmul.f32 %v1484, %v1515
    %v1519 = vmul.f32 %v1485, %v1515
    %v1520 = vmul.f32 %v1486, %v1515
    %v1521 = vmul.f32 %v1487, %v1515
    %v1522 = vmul.f32 %v1488, %v1515
    %v1523 = vmul.f32 %v1489, %v1515
    %v1524 = vmul.f32 %v1490, %v1515
    %v1525 = vmul.f32 %v1491, %v1515
    %v1526 = vmul.f32 %v1492, %v1515
    %v1527 = vmul.f32 %v1493, %v1515
    %v1528 = vmul.f32 %v1494, %v1515
    %v1529 = vmul.f32 %v1495, %v1515
    %v1530 = vmul.f32 %v1496, %v1515
    %v1531 = vmul.f32 %v1497, %v1515
    %v1532 = vmul.f32 %v1498, %v1515
    %v1533 = vmul.f32 %v1499, %v1515
    %v1534 = vmul.f32 %v1500, %v1515
    %v1535 = vmul.f32 %v1501, %v1515
    %v1536 = vmul.f32 %v1502, %v1515
    %v1537 = vmul.f32 %v1503, %v1515
    %v1538 = vmul.f32 %v1504, %v1515
    %v1539 = vmul.f32 %v1505, %v1515
    %v1540 = vmul.f32 %v1506, %v1515
    %v1541 = vmul.f32 %v1507, %v1515
    %v1542 = vmul.f32 %v1508, %v1515
    %v1543 = vmul.f32 %v1509, %v1515
    %v1544 = vmul.f32 %v1510, %v1515
    %v1545 = vmul.f32 %v1511, %v1515
    %v1546 = vlaneseq
    %v1547 = vshrl.u32 %v1546, 7
    %v1548 = vsub.s32 0, %v1547
    %v1549 = vrot.slane %v1120, %v1548
    %v1550 = vadd.f32 %v1516, %v1549
    %v1551 = vadd.f32 %v1517, %v1549
    %v1552 = vadd.f32 %v1518, %v1549
    %v1553 = vadd.f32 %v1519, %v1549
    %v1554 = vadd.f32 %v1520, %v1549
    %v1555 = vadd.f32 %v1521, %v1549
    %v1556 = vadd.f32 %v1522, %v1549
    %v1557 = vadd.f32 %v1523, %v1549
    %v1558 = vadd.f32 %v1524, %v1549
    %v1559 = vadd.f32 %v1525, %v1549
    %v1560 = vadd.f32 %v1526, %v1549
    %v1561 = vadd.f32 %v1527, %v1549
    %v1562 = vadd.f32 %v1528, %v1549
    %v1563 = vadd.f32 %v1529, %v1549
    %v1564 = vadd.f32 %v1530, %v1549
    %v1565 = vadd.f32 %v1531, %v1549
    %v1566 = vadd.f32 %v1532, %v1549
    %v1567 = vadd.f32 %v1533, %v1549
    %v1568 = vadd.f32 %v1534, %v1549
    %v1569 = vadd.f32 %v1535, %v1549
    %v1570 = vadd.f32 %v1536, %v1549
    %v1571 = vadd.f32 %v1537, %v1549
    %v1572 = vadd.f32 %v1538, %v1549
    %v1573 = vadd.f32 %v1539, %v1549
    %v1574 = vadd.f32 %v1540, %v1549
    %v1575 = vadd.f32 %v1541, %v1549
    %v1576 = vadd.f32 %v1542, %v1549
    %v1577 = vadd.f32 %v1543, %v1549
    %v1578 = vadd.f32 %v1544, %v1549
    %v1579 = vadd.f32 %v1545, %v1549
    %v1580 = vld [vmem:[#allocation2] sm:$0xff]
    %v1581 = vld [vmem:[#allocation2 + $0x8] sm:$0xff]
    %v1582 = vld [vmem:[#allocation2 + $0x10] sm:$0xff]
    %v1583 = vld [vmem:[#allocation2 + $0x18] sm:$0xff]
    %v1584 = vld [vmem:[#allocation2 + $0x20] sm:$0xff]
    %v1585 = vld [vmem:[#allocation2 + $0x28] sm:$0xff]
    %v1586 = vld [vmem:[#allocation2 + $0x30] sm:$0xff]
    %v1587 = vld [vmem:[#allocation2 + $0x38] sm:$0xff]
    %v1588 = vld [vmem:[#allocation2 + $0x40] sm:$0xff]
    %v1589 = vld [vmem:[#allocation2 + $0x48] sm:$0xff]
    %v1590 = vld [vmem:[#allocation2 + $0x50] sm:$0xff]
    %v1591 = vld [vmem:[#allocation2 + $0x58] sm:$0xff]
    %v1592 = vld [vmem:[#allocation2 + $0x60] sm:$0xff]
    %v1593 = vld [vmem:[#allocation2 + $0x68] sm:$0xff]
    %v1594 = vld [vmem:[#allocation2 + $0x70] sm:$0xff]
    %v1595 = vld [vmem:[#allocation2 + $0x78] sm:$0xff]
    %v1596 = vld [vmem:[#allocation2 + $0x80] sm:$0xff]
    %v1597 = vld [vmem:[#allocation2 + $0x88] sm:$0xff]
    %v1598 = vld [vmem:[#allocation2 + $0x90] sm:$0xff]
    %v1599 = vld [vmem:[#allocation2 + $0x98] sm:$0xff]
    %v1600 = vld [vmem:[#allocation2 + $0xa0] sm:$0xff]
    %v1601 = vld [vmem:[#allocation2 + $0xa8] sm:$0xff]
    %v1602 = vld [vmem:[#allocation2 + $0xb0] sm:$0xff]
    %v1603 = vld [vmem:[#allocation2 + $0xb8] sm:$0xff]
    %v1604 = vld [vmem:[#allocation2 + $0xc0] sm:$0xff]
    %v1605 = vld [vmem:[#allocation2 + $0xc8] sm:$0xff]
    %v1606 = vld [vmem:[#allocation2 + $0xd0] sm:$0xff]
    %v1607 = vld [vmem:[#allocation2 + $0xd8] sm:$0xff]
    %v1608 = vld [vmem:[#allocation2 + $0xe0] sm:$0xff]
    %v1609 = vld [vmem:[#allocation2 + $0xe8] sm:$0xff]
    %v1610 = vadd.f32 %v1550, %v1580
    %v1611 = vadd.f32 %v1551, %v1581
    %v1612 = vadd.f32 %v1552, %v1582
    %v1613 = vadd.f32 %v1553, %v1583
    %v1614 = vadd.f32 %v1554, %v1584
    %v1615 = vadd.f32 %v1555, %v1585
    %v1616 = vadd.f32 %v1556, %v1586
    %v1617 = vadd.f32 %v1557, %v1587
    %v1618 = vadd.f32 %v1558, %v1588
    %v1619 = vadd.f32 %v1559, %v1589
    %v1620 = vadd.f32 %v1560, %v1590
    %v1621 = vadd.f32 %v1561, %v1591
    %v1622 = vadd.f32 %v1562, %v1592
    %v1623 = vadd.f32 %v1563, %v1593
    %v1624 = vadd.f32 %v1564, %v1594
    %v1625 = vadd.f32 %v1565, %v1595
    %v1626 = vadd.f32 %v1566, %v1596
    %v1627 = vadd.f32 %v1567, %v1597
    %v1628 = vadd.f32 %v1568, %v1598
    %v1629 = vadd.f32 %v1569, %v1599
    %v1630 = vadd.f32 %v1570, %v1600
    %v1631 = vadd.f32 %v1571, %v1601
    %v1632 = vadd.f32 %v1572, %v1602
    %v1633 = vadd.f32 %v1573, %v1603
    %v1634 = vadd.f32 %v1574, %v1604
    %v1635 = vadd.f32 %v1575, %v1605
    %v1636 = vadd.f32 %v1576, %v1606
    %v1637 = vadd.f32 %v1577, %v1607
    %v1638 = vadd.f32 %v1578, %v1608
    %v1639 = vadd.f32 %v1579, %v1609
    %v1640 = vld [vmem:[#allocation3 + $0x6] sm:$0x1]
    %v1641 = vlaneseq
    %v1642 = vshrl.u32 %v1641, 7
    %v1643 = vsub.s32 0, %v1642
    %v1644 = vrot.slane %v1640, %v1643
    %v1645 = vmul.f32 %v1610, %v1644
    %v1646 = vmul.f32 %v1611, %v1644
    %v1647 = vmul.f32 %v1612, %v1644
    %v1648 = vmul.f32 %v1613, %v1644
    %v1649 = vmul.f32 %v1614, %v1644
    %v1650 = vmul.f32 %v1615, %v1644
    %v1651 = vmul.f32 %v1616, %v1644
    %v1652 = vmul.f32 %v1617, %v1644
    %v1653 = vmul.f32 %v1618, %v1644
    %v1654 = vmul.f32 %v1619, %v1644
    %v1655 = vmul.f32 %v1620, %v1644
    %v1656 = vmul.f32 %v1621, %v1644
    %v1657 = vmul.f32 %v1622, %v1644
    %v1658 = vmul.f32 %v1623, %v1644
    %v1659 = vmul.f32 %v1624, %v1644
    %v1660 = vmul.f32 %v1625, %v1644
    %v1661 = vmul.f32 %v1626, %v1644
    %v1662 = vmul.f32 %v1627, %v1644
    %v1663 = vmul.f32 %v1628, %v1644
    %v1664 = vmul.f32 %v1629, %v1644
    %v1665 = vmul.f32 %v1630, %v1644
    %v1666 = vmul.f32 %v1631, %v1644
    %v1667 = vmul.f32 %v1632, %v1644
    %v1668 = vmul.f32 %v1633, %v1644
    %v1669 = vmul.f32 %v1634, %v1644
    %v1670 = vmul.f32 %v1635, %v1644
    %v1671 = vmul.f32 %v1636, %v1644
    %v1672 = vmul.f32 %v1637, %v1644
    %v1673 = vmul.f32 %v1638, %v1644
    %v1674 = vmul.f32 %v1639, %v1644
    %v1675 = vsel %vm88, %v1645, 0.0
    %1676 = vadd.xlane.f32.xlu0 %v1675
    %v1677 = vpop.xlane.xlu0 %1676
    %v1678 = vsel %vm88, %v1646, 0.0
    %1679 = vadd.xlane.f32.xlu0 %v1678
    %v1680 = vpop.xlane.xlu0 %1679
    %v1681 = vsel %vm88, %v1647, 0.0
    %1682 = vadd.xlane.f32.xlu0 %v1681
    %v1683 = vpop.xlane.xlu0 %1682
    %v1684 = vsel %vm88, %v1648, 0.0
    %1685 = vadd.xlane.f32.xlu0 %v1684
    %v1686 = vpop.xlane.xlu0 %1685
    %v1687 = vsel %vm88, %v1649, 0.0
    %1688 = vadd.xlane.f32.xlu0 %v1687
    %v1689 = vpop.xlane.xlu0 %1688
    %v1690 = vsel %vm88, %v1650, 0.0
    %1691 = vadd.xlane.f32.xlu0 %v1690
    %v1692 = vpop.xlane.xlu0 %1691
    %v1693 = vsel %vm88, %v1651, 0.0
    %1694 = vadd.xlane.f32.xlu0 %v1693
    %v1695 = vpop.xlane.xlu0 %1694
    %v1696 = vsel %vm88, %v1652, 0.0
    %1697 = vadd.xlane.f32.xlu0 %v1696
    %v1698 = vpop.xlane.xlu0 %1697
    %v1699 = vsel %vm88, %v1653, 0.0
    %1700 = vadd.xlane.f32.xlu0 %v1699
    %v1701 = vpop.xlane.xlu0 %1700
    %v1702 = vsel %vm88, %v1654, 0.0
    %1703 = vadd.xlane.f32.xlu0 %v1702
    %v1704 = vpop.xlane.xlu0 %1703
    %v1705 = vsel %vm88, %v1655, 0.0
    %1706 = vadd.xlane.f32.xlu0 %v1705
    %v1707 = vpop.xlane.xlu0 %1706
    %v1708 = vsel %vm88, %v1656, 0.0
    %1709 = vadd.xlane.f32.xlu0 %v1708
    %v1710 = vpop.xlane.xlu0 %1709
    %v1711 = vsel %vm88, %v1657, 0.0
    %1712 = vadd.xlane.f32.xlu0 %v1711
    %v1713 = vpop.xlane.xlu0 %1712
    %v1714 = vsel %vm88, %v1658, 0.0
    %1715 = vadd.xlane.f32.xlu0 %v1714
    %v1716 = vpop.xlane.xlu0 %1715
    %v1717 = vsel %vm88, %v1659, 0.0
    %1718 = vadd.xlane.f32.xlu0 %v1717
    %v1719 = vpop.xlane.xlu0 %1718
    %v1720 = vsel %vm88, %v1660, 0.0
    %1721 = vadd.xlane.f32.xlu0 %v1720
    %v1722 = vpop.xlane.xlu0 %1721
    %v1723 = vsel %vm88, %v1661, 0.0
    %1724 = vadd.xlane.f32.xlu0 %v1723
    %v1725 = vpop.xlane.xlu0 %1724
    %v1726 = vsel %vm88, %v1662, 0.0
    %1727 = vadd.xlane.f32.xlu0 %v1726
    %v1728 = vpop.xlane.xlu0 %1727
    %v1729 = vsel %vm88, %v1663, 0.0
    %1730 = vadd.xlane.f32.xlu0 %v1729
    %v1731 = vpop.xlane.xlu0 %1730
    %v1732 = vsel %vm88, %v1664, 0.0
    %1733 = vadd.xlane.f32.xlu0 %v1732
    %v1734 = vpop.xlane.xlu0 %1733
    %v1735 = vsel %vm88, %v1665, 0.0
    %1736 = vadd.xlane.f32.xlu0 %v1735
    %v1737 = vpop.xlane.xlu0 %1736
    %v1738 = vsel %vm88, %v1666, 0.0
    %1739 = vadd.xlane.f32.xlu0 %v1738
    %v1740 = vpop.xlane.xlu0 %1739
    %v1741 = vsel %vm88, %v1667, 0.0
    %1742 = vadd.xlane.f32.xlu0 %v1741
    %v1743 = vpop.xlane.xlu0 %1742
    %v1744 = vsel %vm88, %v1668, 0.0
    %1745 = vadd.xlane.f32.xlu0 %v1744
    %v1746 = vpop.xlane.xlu0 %1745
    %v1747 = vsel %vm88, %v1669, 0.0
    %1748 = vadd.xlane.f32.xlu0 %v1747
    %v1749 = vpop.xlane.xlu0 %1748
    %v1750 = vsel %vm88, %v1670, 0.0
    %1751 = vadd.xlane.f32.xlu0 %v1750
    %v1752 = vpop.xlane.xlu0 %1751
    %v1753 = vsel %vm88, %v1671, 0.0
    %1754 = vadd.xlane.f32.xlu0 %v1753
    %v1755 = vpop.xlane.xlu0 %1754
    %v1756 = vsel %vm88, %v1672, 0.0
    %1757 = vadd.xlane.f32.xlu0 %v1756
    %v1758 = vpop.xlane.xlu0 %1757
    %v1759 = vsel %vm88, %v1673, 0.0
    %1760 = vadd.xlane.f32.xlu0 %v1759
    %v1761 = vpop.xlane.xlu0 %1760
    %v1762 = vsel %vm88, %v1674, 0.0
    %1763 = vadd.xlane.f32.xlu0 %v1762
    %v1764 = vpop.xlane.xlu0 %1763
    %v1795 = vlaneseq
    %v1796 = vand.u32 %v1795, 127
    %v1797 = vlaneseq
    %v1798 = vshrl.u32 %v1797, 7
    %v1799 = vsub.s32 %v1796, %v1798
    %v1800 = vrot.slane %v1677, %v1799
    %v1801 = vadd.s32 %v1796, 4294967288
    %v1802 = vlaneseq
    %v1803 = vshrl.u32 %v1802, 7
    %v1804 = vsub.s32 %v1801, %v1803
    %v1805 = vrot.slane %v1680, %v1804
    %vm1806 = vcmask 130112
    %v1807 = vsel %vm1806, %v1805, %v1800
    %v1808 = vadd.s32 %v1796, 4294967280
    %v1809 = vlaneseq
    %v1810 = vshrl.u32 %v1809, 7
    %v1811 = vsub.s32 %v1808, %v1810
    %v1812 = vrot.slane %v1683, %v1811
    %vm1813 = vcmask 195712
    %v1814 = vsel %vm1813, %v1812, %v1807
    %v1815 = vadd.s32 %v1796, 4294967272
    %v1816 = vlaneseq
    %v1817 = vshrl.u32 %v1816, 7
    %v1818 = vsub.s32 %v1815, %v1817
    %v1819 = vrot.slane %v1686, %v1818
    %vm1820 = vcmask 261312
    %v1821 = vsel %vm1820, %v1819, %v1814
    %v1822 = vadd.s32 %v1796, 4294967264
    %v1823 = vlaneseq
    %v1824 = vshrl.u32 %v1823, 7
    %v1825 = vsub.s32 %v1822, %v1824
    %v1826 = vrot.slane %v1689, %v1825
    %vm1827 = vcmask 326912
    %v1828 = vsel %vm1827, %v1826, %v1821
    %v1829 = vadd.s32 %v1796, 4294967256
    %v1830 = vlaneseq
    %v1831 = vshrl.u32 %v1830, 7
    %v1832 = vsub.s32 %v1829, %v1831
    %v1833 = vrot.slane %v1692, %v1832
    %vm1834 = vcmask 392512
    %v1835 = vsel %vm1834, %v1833, %v1828
    %v1836 = vadd.s32 %v1796, 4294967248
    %v1837 = vlaneseq
    %v1838 = vshrl.u32 %v1837, 7
    %v1839 = vsub.s32 %v1836, %v1838
    %v1840 = vrot.slane %v1695, %v1839
    %vm1841 = vcmask 458112
    %v1842 = vsel %vm1841, %v1840, %v1835
    %v1843 = vadd.s32 %v1796, 4294967240
    %v1844 = vlaneseq
    %v1845 = vshrl.u32 %v1844, 7
    %v1846 = vsub.s32 %v1843, %v1845
    %v1847 = vrot.slane %v1698, %v1846
    %vm1848 = vcmask 523712
    %v1849 = vsel %vm1848, %v1847, %v1842
    %v1850 = vadd.s32 %v1796, 4294967232
    %v1851 = vlaneseq
    %v1852 = vshrl.u32 %v1851, 7
    %v1853 = vsub.s32 %v1850, %v1852
    %v1854 = vrot.slane %v1701, %v1853
    %vm1855 = vcmask 589312
    %v1856 = vsel %vm1855, %v1854, %v1849
    %v1857 = vadd.s32 %v1796, 4294967224
    %v1858 = vlaneseq
    %v1859 = vshrl.u32 %v1858, 7
    %v1860 = vsub.s32 %v1857, %v1859
    %v1861 = vrot.slane %v1704, %v1860
    %vm1862 = vcmask 654912
    %v1863 = vsel %vm1862, %v1861, %v1856
    %v1864 = vadd.s32 %v1796, 4294967216
    %v1865 = vlaneseq
    %v1866 = vshrl.u32 %v1865, 7
    %v1867 = vsub.s32 %v1864, %v1866
    %v1868 = vrot.slane %v1707, %v1867
    %vm1869 = vcmask 720512
    %v1870 = vsel %vm1869, %v1868, %v1863
    %v1871 = vadd.s32 %v1796, 4294967208
    %v1872 = vlaneseq
    %v1873 = vshrl.u32 %v1872, 7
    %v1874 = vsub.s32 %v1871, %v1873
    %v1875 = vrot.slane %v1710, %v1874
    %vm1876 = vcmask 786112
    %v1877 = vsel %vm1876, %v1875, %v1870
    %v1878 = vadd.s32 %v1796, 4294967200
    %v1879 = vlaneseq
    %v1880 = vshrl.u32 %v1879, 7
    %v1881 = vsub.s32 %v1878, %v1880
    %v1882 = vrot.slane %v1713, %v1881
    %vm1883 = vcmask 851712
    %v1884 = vsel %vm1883, %v1882, %v1877
    %v1885 = vadd.s32 %v1796, 4294967192
    %v1886 = vlaneseq
    %v1887 = vshrl.u32 %v1886, 7
    %v1888 = vsub.s32 %v1885, %v1887
    %v1889 = vrot.slane %v1716, %v1888
    %vm1890 = vcmask 917312
    %v1891 = vsel %vm1890, %v1889, %v1884
    %v1892 = vadd.s32 %v1796, 4294967184
    %v1893 = vlaneseq
    %v1894 = vshrl.u32 %v1893, 7
    %v1895 = vsub.s32 %v1892, %v1894
    %v1896 = vrot.slane %v1719, %v1895
    %vm1897 = vcmask 982912
    %v1898 = vsel %vm1897, %v1896, %v1891
    %v1899 = vlaneseq
    %v1900 = vshrl.u32 %v1899, 7
    %v1901 = vsub.s32 %v1796, %v1900
    %v1902 = vrot.slane %v1722, %v1901
    %v1903 = vlaneseq
    %v1904 = vshrl.u32 %v1903, 7
    %v1905 = vsub.s32 %v1801, %v1904
    %v1906 = vrot.slane %v1725, %v1905
    %v1907 = vsel %vm1806, %v1906, %v1902
    %v1908 = vlaneseq
    %v1909 = vshrl.u32 %v1908, 7
    %v1910 = vsub.s32 %v1808, %v1909
    %v1911 = vrot.slane %v1728, %v1910
    %v1912 = vsel %vm1813, %v1911, %v1907
    %v1913 = vlaneseq
    %v1914 = vshrl.u32 %v1913, 7
    %v1915 = vsub.s32 %v1815, %v1914
    %v1916 = vrot.slane %v1731, %v1915
    %v1917 = vsel %vm1820, %v1916, %v1912
    %v1918 = vlaneseq
    %v1919 = vshrl.u32 %v1918, 7
    %v1920 = vsub.s32 %v1822, %v1919
    %v1921 = vrot.slane %v1734, %v1920
    %v1922 = vsel %vm1827, %v1921, %v1917
    %v1923 = vlaneseq
    %v1924 = vshrl.u32 %v1923, 7
    %v1925 = vsub.s32 %v1829, %v1924
    %v1926 = vrot.slane %v1737, %v1925
    %v1927 = vsel %vm1834, %v1926, %v1922
    %v1928 = vlaneseq
    %v1929 = vshrl.u32 %v1928, 7
    %v1930 = vsub.s32 %v1836, %v1929
    %v1931 = vrot.slane %v1740, %v1930
    %v1932 = vsel %vm1841, %v1931, %v1927
    %v1933 = vlaneseq
    %v1934 = vshrl.u32 %v1933, 7
    %v1935 = vsub.s32 %v1843, %v1934
    %v1936 = vrot.slane %v1743, %v1935
    %v1937 = vsel %vm1848, %v1936, %v1932
    %v1938 = vlaneseq
    %v1939 = vshrl.u32 %v1938, 7
    %v1940 = vsub.s32 %v1850, %v1939
    %v1941 = vrot.slane %v1746, %v1940
    %v1942 = vsel %vm1855, %v1941, %v1937
    %v1943 = vlaneseq
    %v1944 = vshrl.u32 %v1943, 7
    %v1945 = vsub.s32 %v1857, %v1944
    %v1946 = vrot.slane %v1749, %v1945
    %v1947 = vsel %vm1862, %v1946, %v1942
    %v1948 = vlaneseq
    %v1949 = vshrl.u32 %v1948, 7
    %v1950 = vsub.s32 %v1864, %v1949
    %v1951 = vrot.slane %v1752, %v1950
    %v1952 = vsel %vm1869, %v1951, %v1947
    %v1953 = vlaneseq
    %v1954 = vshrl.u32 %v1953, 7
    %v1955 = vsub.s32 %v1871, %v1954
    %v1956 = vrot.slane %v1755, %v1955
    %v1957 = vsel %vm1876, %v1956, %v1952
    %v1958 = vlaneseq
    %v1959 = vshrl.u32 %v1958, 7
    %v1960 = vsub.s32 %v1878, %v1959
    %v1961 = vrot.slane %v1758, %v1960
    %v1962 = vsel %vm1883, %v1961, %v1957
    %v1963 = vlaneseq
    %v1964 = vshrl.u32 %v1963, 7
    %v1965 = vsub.s32 %v1885, %v1964
    %v1966 = vrot.slane %v1761, %v1965
    %v1967 = vsel %vm1890, %v1966, %v1962
    %v1968 = vlaneseq
    %v1969 = vshrl.u32 %v1968, 7
    %v1970 = vsub.s32 %v1892, %v1969
    %v1971 = vrot.slane %v1764, %v1970
    %v1972 = vsel %vm1897, %v1971, %v1967
    %vm1973 = vcmask 1041409
    %v1974 = vsel %vm1973, %v1972, %v1898
    %vm1976 = vcmask 975872
    %v1977 = vsel %vm1976, %v1974, -inf
    %1978 = vmax.xlane.f32.xlu0 %v1977
    %v1979 = vpop.xlane.xlu0 %1978
    %v1981 = vlaneseq
    %v1982 = vshrl.u32 %v1981, 7
    %v1983 = vsub.s32 0, %v1982
    %v1984 = vrot.slane %v1979, %v1983
    %v1985 = vlaneseq
    %v1986 = vshrl.u32 %v1985, 7
    %v1987 = vsub.s32 1, %v1986
    %v1988 = vrot.slane %v1979, %v1987
    %v1991 = vsub.f32 %v1677, %v1984
    %v1992 = vsub.f32 %v1680, %v1984
    %v1993 = vsub.f32 %v1683, %v1984
    %v1994 = vsub.f32 %v1686, %v1984
    %v1995 = vsub.f32 %v1689, %v1984
    %v1996 = vsub.f32 %v1692, %v1984
    %v1997 = vsub.f32 %v1695, %v1984
    %v1998 = vsub.f32 %v1698, %v1984
    %v1999 = vsub.f32 %v1701, %v1984
    %v2000 = vsub.f32 %v1704, %v1984
    %v2001 = vsub.f32 %v1707, %v1984
    %v2002 = vsub.f32 %v1710, %v1984
    %v2003 = vsub.f32 %v1713, %v1984
    %v2004 = vsub.f32 %v1716, %v1984
    %v2005 = vsub.f32 %v1719, %v1984
    %v2006 = vsub.f32 %v1722, %v1988
    %v2007 = vsub.f32 %v1725, %v1988
    %v2008 = vsub.f32 %v1728, %v1988
    %v2009 = vsub.f32 %v1731, %v1988
    %v2010 = vsub.f32 %v1734, %v1988
    %v2011 = vsub.f32 %v1737, %v1988
    %v2012 = vsub.f32 %v1740, %v1988
    %v2013 = vsub.f32 %v1743, %v1988
    %v2014 = vsub.f32 %v1746, %v1988
    %v2015 = vsub.f32 %v1749, %v1988
    %v2016 = vsub.f32 %v1752, %v1988
    %v2017 = vsub.f32 %v1755, %v1988
    %v2018 = vsub.f32 %v1758, %v1988
    %v2019 = vsub.f32 %v1761, %v1988
    %v2020 = vsub.f32 %v1764, %v1988
    %v2021 = vmul.f32 %v1991, 1.442695
    %v2022 = vpow.pop %v2021
    %v2023 = vmul.f32 %v1992, 1.442695
    %v2024 = vpow.pop %v2023
    %v2025 = vmul.f32 %v1993, 1.442695
    %v2026 = vpow.pop %v2025
    %v2027 = vmul.f32 %v1994, 1.442695
    %v2028 = vpow.pop %v2027
    %v2029 = vmul.f32 %v1995, 1.442695
    %v2030 = vpow.pop %v2029
    %v2031 = vmul.f32 %v1996, 1.442695
    %v2032 = vpow.pop %v2031
    %v2033 = vmul.f32 %v1997, 1.442695
    %v2034 = vpow.pop %v2033
    %v2035 = vmul.f32 %v1998, 1.442695
    %v2036 = vpow.pop %v2035
    %v2037 = vmul.f32 %v1999, 1.442695
    %v2038 = vpow.pop %v2037
    %v2039 = vmul.f32 %v2000, 1.442695
    %v2040 = vpow.pop %v2039
    %v2041 = vmul.f32 %v2001, 1.442695
    %v2042 = vpow.pop %v2041
    %v2043 = vmul.f32 %v2002, 1.442695
    %v2044 = vpow.pop %v2043
    %v2045 = vmul.f32 %v2003, 1.442695
    %v2046 = vpow.pop %v2045
    %v2047 = vmul.f32 %v2004, 1.442695
    %v2048 = vpow.pop %v2047
    %v2049 = vmul.f32 %v2005, 1.442695
    %v2050 = vpow.pop %v2049
    %v2051 = vmul.f32 %v2006, 1.442695
    %v2052 = vpow.pop %v2051
    %v2053 = vmul.f32 %v2007, 1.442695
    %v2054 = vpow.pop %v2053
    %v2055 = vmul.f32 %v2008, 1.442695
    %v2056 = vpow.pop %v2055
    %v2057 = vmul.f32 %v2009, 1.442695
    %v2058 = vpow.pop %v2057
    %v2059 = vmul.f32 %v2010, 1.442695
    %v2060 = vpow.pop %v2059
    %v2061 = vmul.f32 %v2011, 1.442695
    %v2062 = vpow.pop %v2061
    %v2063 = vmul.f32 %v2012, 1.442695
    %v2064 = vpow.pop %v2063
    %v2065 = vmul.f32 %v2013, 1.442695
    %v2066 = vpow.pop %v2065
    %v2067 = vmul.f32 %v2014, 1.442695
    %v2068 = vpow.pop %v2067
    %v2069 = vmul.f32 %v2015, 1.442695
    %v2070 = vpow.pop %v2069
    %v2071 = vmul.f32 %v2016, 1.442695
    %v2072 = vpow.pop %v2071
    %v2073 = vmul.f32 %v2017, 1.442695
    %v2074 = vpow.pop %v2073
    %v2075 = vmul.f32 %v2018, 1.442695
    %v2076 = vpow.pop %v2075
    %v2077 = vmul.f32 %v2019, 1.442695
    %v2078 = vpow.pop %v2077
    %v2079 = vmul.f32 %v2020, 1.442695
    %v2080 = vpow.pop %v2079
    %2111 = vset.pattern.permute.xlu0 0
    %2112 = vperm.xlu0 %2111, %v2022
    %v2113 = vpop.permute.xlu0 %2112
    %2114 = vset.pattern.permute.xlu0 0
    %2115 = vperm.xlu0 %2114, %v2024
    %v2116 = vpop.permute.xlu0 %2115
    %2117 = vset.pattern.permute.xlu0 0
    %2118 = vperm.xlu0 %2117, %v2026
    %v2119 = vpop.permute.xlu0 %2118
    %2120 = vset.pattern.permute.xlu0 0
    %2121 = vperm.xlu0 %2120, %v2028
    %v2122 = vpop.permute.xlu0 %2121
    %2123 = vset.pattern.permute.xlu0 0
    %2124 = vperm.xlu0 %2123, %v2030
    %v2125 = vpop.permute.xlu0 %2124
    %2126 = vset.pattern.permute.xlu0 0
    %2127 = vperm.xlu0 %2126, %v2032
    %v2128 = vpop.permute.xlu0 %2127
    %2129 = vset.pattern.permute.xlu0 0
    %2130 = vperm.xlu0 %2129, %v2034
    %v2131 = vpop.permute.xlu0 %2130
    %2132 = vset.pattern.permute.xlu0 0
    %2133 = vperm.xlu0 %2132, %v2036
    %v2134 = vpop.permute.xlu0 %2133
    %2135 = vset.pattern.permute.xlu0 0
    %2136 = vperm.xlu0 %2135, %v2038
    %v2137 = vpop.permute.xlu0 %2136
    %2138 = vset.pattern.permute.xlu0 0
    %2139 = vperm.xlu0 %2138, %v2040
    %v2140 = vpop.permute.xlu0 %2139
    %2141 = vset.pattern.permute.xlu0 0
    %2142 = vperm.xlu0 %2141, %v2042
    %v2143 = vpop.permute.xlu0 %2142
    %2144 = vset.pattern.permute.xlu0 0
    %2145 = vperm.xlu0 %2144, %v2044
    %v2146 = vpop.permute.xlu0 %2145
    %2147 = vset.pattern.permute.xlu0 0
    %2148 = vperm.xlu0 %2147, %v2046
    %v2149 = vpop.permute.xlu0 %2148
    %2150 = vset.pattern.permute.xlu0 0
    %2151 = vperm.xlu0 %2150, %v2048
    %v2152 = vpop.permute.xlu0 %2151
    %2153 = vset.pattern.permute.xlu0 0
    %2154 = vperm.xlu0 %2153, %v2050
    %v2155 = vpop.permute.xlu0 %2154
    %2156 = vset.pattern.permute.xlu0 0
    %2157 = vperm.xlu0 %2156, %v2052
    %v2158 = vpop.permute.xlu0 %2157
    %2159 = vset.pattern.permute.xlu0 0
    %2160 = vperm.xlu0 %2159, %v2054
    %v2161 = vpop.permute.xlu0 %2160
    %2162 = vset.pattern.permute.xlu0 0
    %2163 = vperm.xlu0 %2162, %v2056
    %v2164 = vpop.permute.xlu0 %2163
    %2165 = vset.pattern.permute.xlu0 0
    %2166 = vperm.xlu0 %2165, %v2058
    %v2167 = vpop.permute.xlu0 %2166
    %2168 = vset.pattern.permute.xlu0 0
    %2169 = vperm.xlu0 %2168, %v2060
    %v2170 = vpop.permute.xlu0 %2169
    %2171 = vset.pattern.permute.xlu0 0
    %2172 = vperm.xlu0 %2171, %v2062
    %v2173 = vpop.permute.xlu0 %2172
    %2174 = vset.pattern.permute.xlu0 0
    %2175 = vperm.xlu0 %2174, %v2064
    %v2176 = vpop.permute.xlu0 %2175
    %2177 = vset.pattern.permute.xlu0 0
    %2178 = vperm.xlu0 %2177, %v2066
    %v2179 = vpop.permute.xlu0 %2178
    %2180 = vset.pattern.permute.xlu0 0
    %2181 = vperm.xlu0 %2180, %v2068
    %v2182 = vpop.permute.xlu0 %2181
    %2183 = vset.pattern.permute.xlu0 0
    %2184 = vperm.xlu0 %2183, %v2070
    %v2185 = vpop.permute.xlu0 %2184
    %2186 = vset.pattern.permute.xlu0 0
    %2187 = vperm.xlu0 %2186, %v2072
    %v2188 = vpop.permute.xlu0 %2187
    %2189 = vset.pattern.permute.xlu0 0
    %2190 = vperm.xlu0 %2189, %v2074
    %v2191 = vpop.permute.xlu0 %2190
    %2192 = vset.pattern.permute.xlu0 0
    %2193 = vperm.xlu0 %2192, %v2076
    %v2194 = vpop.permute.xlu0 %2193
    %2195 = vset.pattern.permute.xlu0 0
    %2196 = vperm.xlu0 %2195, %v2078
    %v2197 = vpop.permute.xlu0 %2196
    %2198 = vset.pattern.permute.xlu0 0
    %2199 = vperm.xlu0 %2198, %v2080
    %v2200 = vpop.permute.xlu0 %2199
    %v2201 = vlaneseq
    %v2202 = vshrl.u32 %v2201, 7
    %v2203 = vsub.s32 %v1796, %v2202
    %v2204 = vrot.slane %v2113, %v2203
    %v2205 = vlaneseq
    %v2206 = vshrl.u32 %v2205, 7
    %v2207 = vsub.s32 %v1801, %v2206
    %v2208 = vrot.slane %v2116, %v2207
    %v2209 = vsel %vm1806, %v2208, %v2204
    %v2210 = vlaneseq
    %v2211 = vshrl.u32 %v2210, 7
    %v2212 = vsub.s32 %v1808, %v2211
    %v2213 = vrot.slane %v2119, %v2212
    %v2214 = vsel %vm1813, %v2213, %v2209
    %v2215 = vlaneseq
    %v2216 = vshrl.u32 %v2215, 7
    %v2217 = vsub.s32 %v1815, %v2216
    %v2218 = vrot.slane %v2122, %v2217
    %v2219 = vsel %vm1820, %v2218, %v2214
    %v2220 = vlaneseq
    %v2221 = vshrl.u32 %v2220, 7
    %v2222 = vsub.s32 %v1822, %v2221
    %v2223 = vrot.slane %v2125, %v2222
    %v2224 = vsel %vm1827, %v2223, %v2219
    %v2225 = vlaneseq
    %v2226 = vshrl.u32 %v2225, 7
    %v2227 = vsub.s32 %v1829, %v2226
    %v2228 = vrot.slane %v2128, %v2227
    %v2229 = vsel %vm1834, %v2228, %v2224
    %v2230 = vlaneseq
    %v2231 = vshrl.u32 %v2230, 7
    %v2232 = vsub.s32 %v1836, %v2231
    %v2233 = vrot.slane %v2131, %v2232
    %v2234 = vsel %vm1841, %v2233, %v2229
    %v2235 = vlaneseq
    %v2236 = vshrl.u32 %v2235, 7
    %v2237 = vsub.s32 %v1843, %v2236
    %v2238 = vrot.slane %v2134, %v2237
    %v2239 = vsel %vm1848, %v2238, %v2234
    %v2240 = vlaneseq
    %v2241 = vshrl.u32 %v2240, 7
    %v2242 = vsub.s32 %v1850, %v2241
    %v2243 = vrot.slane %v2137, %v2242
    %v2244 = vsel %vm1855, %v2243, %v2239
    %v2245 = vlaneseq
    %v2246 = vshrl.u32 %v2245, 7
    %v2247 = vsub.s32 %v1857, %v2246
    %v2248 = vrot.slane %v2140, %v2247
    %v2249 = vsel %vm1862, %v2248, %v2244
    %v2250 = vlaneseq
    %v2251 = vshrl.u32 %v2250, 7
    %v2252 = vsub.s32 %v1864, %v2251
    %v2253 = vrot.slane %v2143, %v2252
    %v2254 = vsel %vm1869, %v2253, %v2249
    %v2255 = vlaneseq
    %v2256 = vshrl.u32 %v2255, 7
    %v2257 = vsub.s32 %v1871, %v2256
    %v2258 = vrot.slane %v2146, %v2257
    %v2259 = vsel %vm1876, %v2258, %v2254
    %v2260 = vlaneseq
    %v2261 = vshrl.u32 %v2260, 7
    %v2262 = vsub.s32 %v1878, %v2261
    %v2263 = vrot.slane %v2149, %v2262
    %v2264 = vsel %vm1883, %v2263, %v2259
    %v2265 = vlaneseq
    %v2266 = vshrl.u32 %v2265, 7
    %v2267 = vsub.s32 %v1885, %v2266
    %v2268 = vrot.slane %v2152, %v2267
    %v2269 = vsel %vm1890, %v2268, %v2264
    %v2270 = vlaneseq
    %v2271 = vshrl.u32 %v2270, 7
    %v2272 = vsub.s32 %v1892, %v2271
    %v2273 = vrot.slane %v2155, %v2272
    %v2274 = vsel %vm1897, %v2273, %v2269
    %v2275 = vlaneseq
    %v2276 = vshrl.u32 %v2275, 7
    %v2277 = vsub.s32 %v1796, %v2276
    %v2278 = vrot.slane %v2158, %v2277
    %v2279 = vlaneseq
    %v2280 = vshrl.u32 %v2279, 7
    %v2281 = vsub.s32 %v1801, %v2280
    %v2282 = vrot.slane %v2161, %v2281
    %v2283 = vsel %vm1806, %v2282, %v2278
    %v2284 = vlaneseq
    %v2285 = vshrl.u32 %v2284, 7
    %v2286 = vsub.s32 %v1808, %v2285
    %v2287 = vrot.slane %v2164, %v2286
    %v2288 = vsel %vm1813, %v2287, %v2283
    %v2289 = vlaneseq
    %v2290 = vshrl.u32 %v2289, 7
    %v2291 = vsub.s32 %v1815, %v2290
    %v2292 = vrot.slane %v2167, %v2291
    %v2293 = vsel %vm1820, %v2292, %v2288
    %v2294 = vlaneseq
    %v2295 = vshrl.u32 %v2294, 7
    %v2296 = vsub.s32 %v1822, %v2295
    %v2297 = vrot.slane %v2170, %v2296
    %v2298 = vsel %vm1827, %v2297, %v2293
    %v2299 = vlaneseq
    %v2300 = vshrl.u32 %v2299, 7
    %v2301 = vsub.s32 %v1829, %v2300
    %v2302 = vrot.slane %v2173, %v2301
    %v2303 = vsel %vm1834, %v2302, %v2298
    %v2304 = vlaneseq
    %v2305 = vshrl.u32 %v2304, 7
    %v2306 = vsub.s32 %v1836, %v2305
    %v2307 = vrot.slane %v2176, %v2306
    %v2308 = vsel %vm1841, %v2307, %v2303
    %v2309 = vlaneseq
    %v2310 = vshrl.u32 %v2309, 7
    %v2311 = vsub.s32 %v1843, %v2310
    %v2312 = vrot.slane %v2179, %v2311
    %v2313 = vsel %vm1848, %v2312, %v2308
    %v2314 = vlaneseq
    %v2315 = vshrl.u32 %v2314, 7
    %v2316 = vsub.s32 %v1850, %v2315
    %v2317 = vrot.slane %v2182, %v2316
    %v2318 = vsel %vm1855, %v2317, %v2313
    %v2319 = vlaneseq
    %v2320 = vshrl.u32 %v2319, 7
    %v2321 = vsub.s32 %v1857, %v2320
    %v2322 = vrot.slane %v2185, %v2321
    %v2323 = vsel %vm1862, %v2322, %v2318
    %v2324 = vlaneseq
    %v2325 = vshrl.u32 %v2324, 7
    %v2326 = vsub.s32 %v1864, %v2325
    %v2327 = vrot.slane %v2188, %v2326
    %v2328 = vsel %vm1869, %v2327, %v2323
    %v2329 = vlaneseq
    %v2330 = vshrl.u32 %v2329, 7
    %v2331 = vsub.s32 %v1871, %v2330
    %v2332 = vrot.slane %v2191, %v2331
    %v2333 = vsel %vm1876, %v2332, %v2328
    %v2334 = vlaneseq
    %v2335 = vshrl.u32 %v2334, 7
    %v2336 = vsub.s32 %v1878, %v2335
    %v2337 = vrot.slane %v2194, %v2336
    %v2338 = vsel %vm1883, %v2337, %v2333
    %v2339 = vlaneseq
    %v2340 = vshrl.u32 %v2339, 7
    %v2341 = vsub.s32 %v1885, %v2340
    %v2342 = vrot.slane %v2197, %v2341
    %v2343 = vsel %vm1890, %v2342, %v2338
    %v2344 = vlaneseq
    %v2345 = vshrl.u32 %v2344, 7
    %v2346 = vsub.s32 %v1892, %v2345
    %v2347 = vrot.slane %v2200, %v2346
    %v2348 = vsel %vm1897, %v2347, %v2343
    %v2349 = vsel %vm1973, %v2348, %v2274
    %v2351 = vsel %vm1976, %v2349, 0.0
    %2352 = vadd.xlane.f32.xlu0 %v2351
    %v2353 = vpop.xlane.xlu0 %2352
    %v2355 = vlaneseq
    %v2356 = vshrl.u32 %v2355, 7
    %v2357 = vsub.s32 0, %v2356
    %v2358 = vrot.slane %v2353, %v2357
    %v2359 = vlaneseq
    %v2360 = vshrl.u32 %v2359, 7
    %v2361 = vsub.s32 1, %v2360
    %v2362 = vrot.slane %v2353, %v2361
    %v2365 = vrcp.pop %v2358
    %v2366 = vmul.f32 %v2022, %v2365
    %v2367 = vmul.f32 %v2024, %v2365
    %v2368 = vmul.f32 %v2026, %v2365
    %v2369 = vmul.f32 %v2028, %v2365
    %v2370 = vmul.f32 %v2030, %v2365
    %v2371 = vmul.f32 %v2032, %v2365
    %v2372 = vmul.f32 %v2034, %v2365
    %v2373 = vmul.f32 %v2036, %v2365
    %v2374 = vmul.f32 %v2038, %v2365
    %v2375 = vmul.f32 %v2040, %v2365
    %v2376 = vmul.f32 %v2042, %v2365
    %v2377 = vmul.f32 %v2044, %v2365
    %v2378 = vmul.f32 %v2046, %v2365
    %v2379 = vmul.f32 %v2048, %v2365
    %v2380 = vmul.f32 %v2050, %v2365
    %v2381 = vrcp.pop %v2362
    %v2382 = vmul.f32 %v2052, %v2381
    %v2383 = vmul.f32 %v2054, %v2381
    %v2384 = vmul.f32 %v2056, %v2381
    %v2385 = vmul.f32 %v2058, %v2381
    %v2386 = vmul.f32 %v2060, %v2381
    %v2387 = vmul.f32 %v2062, %v2381
    %v2388 = vmul.f32 %v2064, %v2381
    %v2389 = vmul.f32 %v2066, %v2381
    %v2390 = vmul.f32 %v2068, %v2381
    %v2391 = vmul.f32 %v2070, %v2381
    %v2392 = vmul.f32 %v2072, %v2381
    %v2393 = vmul.f32 %v2074, %v2381
    %v2394 = vmul.f32 %v2076, %v2381
    %v2395 = vmul.f32 %v2078, %v2381
    %v2396 = vmul.f32 %v2080, %v2381
    %2427 = vset.pattern.permute.xlu0 0
    %2428 = vperm.xlu0 %2427, %v2366
    %v2429 = vpop.permute.xlu0 %2428
    %2430 = vset.pattern.permute.xlu0 0
    %2431 = vperm.xlu0 %2430, %v2367
    %v2432 = vpop.permute.xlu0 %2431
    %2433 = vset.pattern.permute.xlu0 0
    %2434 = vperm.xlu0 %2433, %v2368
    %v2435 = vpop.permute.xlu0 %2434
    %2436 = vset.pattern.permute.xlu0 0
    %2437 = vperm.xlu0 %2436, %v2369
    %v2438 = vpop.permute.xlu0 %2437
    %2439 = vset.pattern.permute.xlu0 0
    %2440 = vperm.xlu0 %2439, %v2370
    %v2441 = vpop.permute.xlu0 %2440
    %2442 = vset.pattern.permute.xlu0 0
    %2443 = vperm.xlu0 %2442, %v2371
    %v2444 = vpop.permute.xlu0 %2443
    %2445 = vset.pattern.permute.xlu0 0
    %2446 = vperm.xlu0 %2445, %v2372
    %v2447 = vpop.permute.xlu0 %2446
    %2448 = vset.pattern.permute.xlu0 0
    %2449 = vperm.xlu0 %2448, %v2373
    %v2450 = vpop.permute.xlu0 %2449
    %2451 = vset.pattern.permute.xlu0 0
    %2452 = vperm.xlu0 %2451, %v2374
    %v2453 = vpop.permute.xlu0 %2452
    %2454 = vset.pattern.permute.xlu0 0
    %2455 = vperm.xlu0 %2454, %v2375
    %v2456 = vpop.permute.xlu0 %2455
    %2457 = vset.pattern.permute.xlu0 0
    %2458 = vperm.xlu0 %2457, %v2376
    %v2459 = vpop.permute.xlu0 %2458
    %2460 = vset.pattern.permute.xlu0 0
    %2461 = vperm.xlu0 %2460, %v2377
    %v2462 = vpop.permute.xlu0 %2461
    %2463 = vset.pattern.permute.xlu0 0
    %2464 = vperm.xlu0 %2463, %v2378
    %v2465 = vpop.permute.xlu0 %2464
    %2466 = vset.pattern.permute.xlu0 0
    %2467 = vperm.xlu0 %2466, %v2379
    %v2468 = vpop.permute.xlu0 %2467
    %2469 = vset.pattern.permute.xlu0 0
    %2470 = vperm.xlu0 %2469, %v2380
    %v2471 = vpop.permute.xlu0 %2470
    %2472 = vset.pattern.permute.xlu0 0
    %2473 = vperm.xlu0 %2472, %v2382
    %v2474 = vpop.permute.xlu0 %2473
    %2475 = vset.pattern.permute.xlu0 0
    %2476 = vperm.xlu0 %2475, %v2383
    %v2477 = vpop.permute.xlu0 %2476
    %2478 = vset.pattern.permute.xlu0 0
    %2479 = vperm.xlu0 %2478, %v2384
    %v2480 = vpop.permute.xlu0 %2479
    %2481 = vset.pattern.permute.xlu0 0
    %2482 = vperm.xlu0 %2481, %v2385
    %v2483 = vpop.permute.xlu0 %2482
    %2484 = vset.pattern.permute.xlu0 0
    %2485 = vperm.xlu0 %2484, %v2386
    %v2486 = vpop.permute.xlu0 %2485
    %2487 = vset.pattern.permute.xlu0 0
    %2488 = vperm.xlu0 %2487, %v2387
    %v2489 = vpop.permute.xlu0 %2488
    %2490 = vset.pattern.permute.xlu0 0
    %2491 = vperm.xlu0 %2490, %v2388
    %v2492 = vpop.permute.xlu0 %2491
    %2493 = vset.pattern.permute.xlu0 0
    %2494 = vperm.xlu0 %2493, %v2389
    %v2495 = vpop.permute.xlu0 %2494
    %2496 = vset.pattern.permute.xlu0 0
    %2497 = vperm.xlu0 %2496, %v2390
    %v2498 = vpop.permute.xlu0 %2497
    %2499 = vset.pattern.permute.xlu0 0
    %2500 = vperm.xlu0 %2499, %v2391
    %v2501 = vpop.permute.xlu0 %2500
    %2502 = vset.pattern.permute.xlu0 0
    %2503 = vperm.xlu0 %2502, %v2392
    %v2504 = vpop.permute.xlu0 %2503
    %2505 = vset.pattern.permute.xlu0 0
    %2506 = vperm.xlu0 %2505, %v2393
    %v2507 = vpop.permute.xlu0 %2506
    %2508 = vset.pattern.permute.xlu0 0
    %2509 = vperm.xlu0 %2508, %v2394
    %v2510 = vpop.permute.xlu0 %2509
    %2511 = vset.pattern.permute.xlu0 0
    %2512 = vperm.xlu0 %2511, %v2395
    %v2513 = vpop.permute.xlu0 %2512
    %2514 = vset.pattern.permute.xlu0 0
    %2515 = vperm.xlu0 %2514, %v2396
    %v2516 = vpop.permute.xlu0 %2515
    %v2517 = vlaneseq
    %v2518 = vshrl.u32 %v2517, 7
    %v2519 = vsub.s32 %v1796, %v2518
    %v2520 = vrot.slane %v2429, %v2519
    %v2521 = vlaneseq
    %v2522 = vshrl.u32 %v2521, 7
    %v2523 = vsub.s32 %v1801, %v2522
    %v2524 = vrot.slane %v2432, %v2523
    %v2525 = vsel %vm1806, %v2524, %v2520
    %v2526 = vlaneseq
    %v2527 = vshrl.u32 %v2526, 7
    %v2528 = vsub.s32 %v1808, %v2527
    %v2529 = vrot.slane %v2435, %v2528
    %v2530 = vsel %vm1813, %v2529, %v2525
    %v2531 = vlaneseq
    %v2532 = vshrl.u32 %v2531, 7
    %v2533 = vsub.s32 %v1815, %v2532
    %v2534 = vrot.slane %v2438, %v2533
    %v2535 = vsel %vm1820, %v2534, %v2530
    %v2536 = vlaneseq
    %v2537 = vshrl.u32 %v2536, 7
    %v2538 = vsub.s32 %v1822, %v2537
    %v2539 = vrot.slane %v2441, %v2538
    %v2540 = vsel %vm1827, %v2539, %v2535
    %v2541 = vlaneseq
    %v2542 = vshrl.u32 %v2541, 7
    %v2543 = vsub.s32 %v1829, %v2542
    %v2544 = vrot.slane %v2444, %v2543
    %v2545 = vsel %vm1834, %v2544, %v2540
    %v2546 = vlaneseq
    %v2547 = vshrl.u32 %v2546, 7
    %v2548 = vsub.s32 %v1836, %v2547
    %v2549 = vrot.slane %v2447, %v2548
    %v2550 = vsel %vm1841, %v2549, %v2545
    %v2551 = vlaneseq
    %v2552 = vshrl.u32 %v2551, 7
    %v2553 = vsub.s32 %v1843, %v2552
    %v2554 = vrot.slane %v2450, %v2553
    %v2555 = vsel %vm1848, %v2554, %v2550
    %v2556 = vlaneseq
    %v2557 = vshrl.u32 %v2556, 7
    %v2558 = vsub.s32 %v1850, %v2557
    %v2559 = vrot.slane %v2453, %v2558
    %v2560 = vsel %vm1855, %v2559, %v2555
    %v2561 = vlaneseq
    %v2562 = vshrl.u32 %v2561, 7
    %v2563 = vsub.s32 %v1857, %v2562
    %v2564 = vrot.slane %v2456, %v2563
    %v2565 = vsel %vm1862, %v2564, %v2560
    %v2566 = vlaneseq
    %v2567 = vshrl.u32 %v2566, 7
    %v2568 = vsub.s32 %v1864, %v2567
    %v2569 = vrot.slane %v2459, %v2568
    %v2570 = vsel %vm1869, %v2569, %v2565
    %v2571 = vlaneseq
    %v2572 = vshrl.u32 %v2571, 7
    %v2573 = vsub.s32 %v1871, %v2572
    %v2574 = vrot.slane %v2462, %v2573
    %v2575 = vsel %vm1876, %v2574, %v2570
    %v2576 = vlaneseq
    %v2577 = vshrl.u32 %v2576, 7
    %v2578 = vsub.s32 %v1878, %v2577
    %v2579 = vrot.slane %v2465, %v2578
    %v2580 = vsel %vm1883, %v2579, %v2575
    %v2581 = vlaneseq
    %v2582 = vshrl.u32 %v2581, 7
    %v2583 = vsub.s32 %v1885, %v2582
    %v2584 = vrot.slane %v2468, %v2583
    %v2585 = vsel %vm1890, %v2584, %v2580
    %v2586 = vlaneseq
    %v2587 = vshrl.u32 %v2586, 7
    %v2588 = vsub.s32 %v1892, %v2587
    %v2589 = vrot.slane %v2471, %v2588
    %v2590 = vsel %vm1897, %v2589, %v2585
    %v2591 = vlaneseq
    %v2592 = vshrl.u32 %v2591, 7
    %v2593 = vsub.s32 %v1796, %v2592
    %v2594 = vrot.slane %v2474, %v2593
    %v2595 = vlaneseq
    %v2596 = vshrl.u32 %v2595, 7
    %v2597 = vsub.s32 %v1801, %v2596
    %v2598 = vrot.slane %v2477, %v2597
    %v2599 = vsel %vm1806, %v2598, %v2594
    %v2600 = vlaneseq
    %v2601 = vshrl.u32 %v2600, 7
    %v2602 = vsub.s32 %v1808, %v2601
    %v2603 = vrot.slane %v2480, %v2602
    %v2604 = vsel %vm1813, %v2603, %v2599
    %v2605 = vlaneseq
    %v2606 = vshrl.u32 %v2605, 7
    %v2607 = vsub.s32 %v1815, %v2606
    %v2608 = vrot.slane %v2483, %v2607
    %v2609 = vsel %vm1820, %v2608, %v2604
    %v2610 = vlaneseq
    %v2611 = vshrl.u32 %v2610, 7
    %v2612 = vsub.s32 %v1822, %v2611
    %v2613 = vrot.slane %v2486, %v2612
    %v2614 = vsel %vm1827, %v2613, %v2609
    %v2615 = vlaneseq
    %v2616 = vshrl.u32 %v2615, 7
    %v2617 = vsub.s32 %v1829, %v2616
    %v2618 = vrot.slane %v2489, %v2617
    %v2619 = vsel %vm1834, %v2618, %v2614
    %v2620 = vlaneseq
    %v2621 = vshrl.u32 %v2620, 7
    %v2622 = vsub.s32 %v1836, %v2621
    %v2623 = vrot.slane %v2492, %v2622
    %v2624 = vsel %vm1841, %v2623, %v2619
    %v2625 = vlaneseq
    %v2626 = vshrl.u32 %v2625, 7
    %v2627 = vsub.s32 %v1843, %v2626
    %v2628 = vrot.slane %v2495, %v2627
    %v2629 = vsel %vm1848, %v2628, %v2624
    %v2630 = vlaneseq
    %v2631 = vshrl.u32 %v2630, 7
    %v2632 = vsub.s32 %v1850, %v2631
    %v2633 = vrot.slane %v2498, %v2632
    %v2634 = vsel %vm1855, %v2633, %v2629
    %v2635 = vlaneseq
    %v2636 = vshrl.u32 %v2635, 7
    %v2637 = vsub.s32 %v1857, %v2636
    %v2638 = vrot.slane %v2501, %v2637
    %v2639 = vsel %vm1862, %v2638, %v2634
    %v2640 = vlaneseq
    %v2641 = vshrl.u32 %v2640, 7
    %v2642 = vsub.s32 %v1864, %v2641
    %v2643 = vrot.slane %v2504, %v2642
    %v2644 = vsel %vm1869, %v2643, %v2639
    %v2645 = vlaneseq
    %v2646 = vshrl.u32 %v2645, 7
    %v2647 = vsub.s32 %v1871, %v2646
    %v2648 = vrot.slane %v2507, %v2647
    %v2649 = vsel %vm1876, %v2648, %v2644
    %v2650 = vlaneseq
    %v2651 = vshrl.u32 %v2650, 7
    %v2652 = vsub.s32 %v1878, %v2651
    %v2653 = vrot.slane %v2510, %v2652
    %v2654 = vsel %vm1883, %v2653, %v2649
    %v2655 = vlaneseq
    %v2656 = vshrl.u32 %v2655, 7
    %v2657 = vsub.s32 %v1885, %v2656
    %v2658 = vrot.slane %v2513, %v2657
    %v2659 = vsel %vm1890, %v2658, %v2654
    %v2660 = vlaneseq
    %v2661 = vshrl.u32 %v2660, 7
    %v2662 = vsub.s32 %v1892, %v2661
    %v2663 = vrot.slane %v2516, %v2662
    %v2664 = vsel %vm1897, %v2663, %v2659
    %v2665 = vsel %vm1973, %v2664, %v2590
    %v2667 = vadd.s32 %v1796, 4294967176
    %v2668 = vlaneseq
    %v2669 = vshrl.u32 %v2668, 7
    %v2670 = vsub.s32 %v2667, %v2669
    %v2671 = vrot.slane %v2429, %v2670
    %v2672 = vlaneseq
    %v2673 = vshrl.u32 %v2672, 7
    %v2674 = vsub.s32 %v1796, %v2673
    %v2675 = vrot.slane %v2432, %v2674
    %v2676 = vlaneseq
    %v2677 = vshrl.u32 %v2676, 7
    %v2678 = vsub.s32 %v1801, %v2677
    %v2679 = vrot.slane %v2435, %v2678
    %v2680 = vsel %vm1806, %v2679, %v2675
    %v2681 = vlaneseq
    %v2682 = vshrl.u32 %v2681, 7
    %v2683 = vsub.s32 %v1808, %v2682
    %v2684 = vrot.slane %v2438, %v2683
    %v2685 = vsel %vm1813, %v2684, %v2680
    %v2686 = vlaneseq
    %v2687 = vshrl.u32 %v2686, 7
    %v2688 = vsub.s32 %v1815, %v2687
    %v2689 = vrot.slane %v2441, %v2688
    %v2690 = vsel %vm1820, %v2689, %v2685
    %v2691 = vlaneseq
    %v2692 = vshrl.u32 %v2691, 7
    %v2693 = vsub.s32 %v1822, %v2692
    %v2694 = vrot.slane %v2444, %v2693
    %v2695 = vsel %vm1827, %v2694, %v2690
    %v2696 = vlaneseq
    %v2697 = vshrl.u32 %v2696, 7
    %v2698 = vsub.s32 %v1829, %v2697
    %v2699 = vrot.slane %v2447, %v2698
    %v2700 = vsel %vm1834, %v2699, %v2695
    %v2701 = vlaneseq
    %v2702 = vshrl.u32 %v2701, 7
    %v2703 = vsub.s32 %v1836, %v2702
    %v2704 = vrot.slane %v2450, %v2703
    %v2705 = vsel %vm1841, %v2704, %v2700
    %v2706 = vlaneseq
    %v2707 = vshrl.u32 %v2706, 7
    %v2708 = vsub.s32 %v1843, %v2707
    %v2709 = vrot.slane %v2453, %v2708
    %v2710 = vsel %vm1848, %v2709, %v2705
    %v2711 = vlaneseq
    %v2712 = vshrl.u32 %v2711, 7
    %v2713 = vsub.s32 %v1850, %v2712
    %v2714 = vrot.slane %v2456, %v2713
    %v2715 = vsel %vm1855, %v2714, %v2710
    %v2716 = vlaneseq
    %v2717 = vshrl.u32 %v2716, 7
    %v2718 = vsub.s32 %v1857, %v2717
    %v2719 = vrot.slane %v2459, %v2718
    %v2720 = vsel %vm1862, %v2719, %v2715
    %v2721 = vlaneseq
    %v2722 = vshrl.u32 %v2721, 7
    %v2723 = vsub.s32 %v1864, %v2722
    %v2724 = vrot.slane %v2462, %v2723
    %v2725 = vsel %vm1869, %v2724, %v2720
    %v2726 = vlaneseq
    %v2727 = vshrl.u32 %v2726, 7
    %v2728 = vsub.s32 %v1871, %v2727
    %v2729 = vrot.slane %v2465, %v2728
    %v2730 = vsel %vm1876, %v2729, %v2725
    %v2731 = vlaneseq
    %v2732 = vshrl.u32 %v2731, 7
    %v2733 = vsub.s32 %v1878, %v2732
    %v2734 = vrot.slane %v2468, %v2733
    %v2735 = vsel %vm1883, %v2734, %v2730
    %v2736 = vlaneseq
    %v2737 = vshrl.u32 %v2736, 7
    %v2738 = vsub.s32 %v1885, %v2737
    %v2739 = vrot.slane %v2471, %v2738
    %v2740 = vsel %vm1890, %v2739, %v2735
    %v2741 = vlaneseq
    %v2742 = vshrl.u32 %v2741, 7
    %v2743 = vsub.s32 %v2667, %v2742
    %v2744 = vrot.slane %v2474, %v2743
    %v2745 = vlaneseq
    %v2746 = vshrl.u32 %v2745, 7
    %v2747 = vsub.s32 %v1796, %v2746
    %v2748 = vrot.slane %v2477, %v2747
    %v2749 = vlaneseq
    %v2750 = vshrl.u32 %v2749, 7
    %v2751 = vsub.s32 %v1801, %v2750
    %v2752 = vrot.slane %v2480, %v2751
    %v2753 = vsel %vm1806, %v2752, %v2748
    %v2754 = vlaneseq
    %v2755 = vshrl.u32 %v2754, 7
    %v2756 = vsub.s32 %v1808, %v2755
    %v2757 = vrot.slane %v2483, %v2756
    %v2758 = vsel %vm1813, %v2757, %v2753
    %v2759 = vlaneseq
    %v2760 = vshrl.u32 %v2759, 7
    %v2761 = vsub.s32 %v1815, %v2760
    %v2762 = vrot.slane %v2486, %v2761
    %v2763 = vsel %vm1820, %v2762, %v2758
    %v2764 = vlaneseq
    %v2765 = vshrl.u32 %v2764, 7
    %v2766 = vsub.s32 %v1822, %v2765
    %v2767 = vrot.slane %v2489, %v2766
    %v2768 = vsel %vm1827, %v2767, %v2763
    %v2769 = vlaneseq
    %v2770 = vshrl.u32 %v2769, 7
    %v2771 = vsub.s32 %v1829, %v2770
    %v2772 = vrot.slane %v2492, %v2771
    %v2773 = vsel %vm1834, %v2772, %v2768
    %v2774 = vlaneseq
    %v2775 = vshrl.u32 %v2774, 7
    %v2776 = vsub.s32 %v1836, %v2775
    %v2777 = vrot.slane %v2495, %v2776
    %v2778 = vsel %vm1841, %v2777, %v2773
    %v2779 = vlaneseq
    %v2780 = vshrl.u32 %v2779, 7
    %v2781 = vsub.s32 %v1843, %v2780
    %v2782 = vrot.slane %v2498, %v2781
    %v2783 = vsel %vm1848, %v2782, %v2778
    %v2784 = vlaneseq
    %v2785 = vshrl.u32 %v2784, 7
    %v2786 = vsub.s32 %v1850, %v2785
    %v2787 = vrot.slane %v2501, %v2786
    %v2788 = vsel %vm1855, %v2787, %v2783
    %v2789 = vlaneseq
    %v2790 = vshrl.u32 %v2789, 7
    %v2791 = vsub.s32 %v1857, %v2790
    %v2792 = vrot.slane %v2504, %v2791
    %v2793 = vsel %vm1862, %v2792, %v2788
    %v2794 = vlaneseq
    %v2795 = vshrl.u32 %v2794, 7
    %v2796 = vsub.s32 %v1864, %v2795
    %v2797 = vrot.slane %v2507, %v2796
    %v2798 = vsel %vm1869, %v2797, %v2793
    %v2799 = vlaneseq
    %v2800 = vshrl.u32 %v2799, 7
    %v2801 = vsub.s32 %v1871, %v2800
    %v2802 = vrot.slane %v2510, %v2801
    %v2803 = vsel %vm1876, %v2802, %v2798
    %v2804 = vlaneseq
    %v2805 = vshrl.u32 %v2804, 7
    %v2806 = vsub.s32 %v1878, %v2805
    %v2807 = vrot.slane %v2513, %v2806
    %v2808 = vsel %vm1883, %v2807, %v2803
    %v2809 = vlaneseq
    %v2810 = vshrl.u32 %v2809, 7
    %v2811 = vsub.s32 %v1885, %v2810
    %v2812 = vrot.slane %v2516, %v2811
    %v2813 = vsel %vm1890, %v2812, %v2808
    %v2814 = vsel %vm1973, %v2744, %v2671
    %v2815 = vsel %vm1973, %v2813, %v2740
    %vm2818 = vcmask 982016
    %v2819 = vsel %vm2818, %v2665, %v2814
    %v2820 = vadd.s32 %v1796, 128
    %v2821 = vlaneseq
    %v2822 = vshrl.u32 %v2821, 7
    %v2823 = vmul.u32 %v2822, 120
    %vm2824 = vcmp.ge.s32.totalorder %v1796, %v2823
    %vm2825 = vcmp.ge.s32.totalorder %v2820, %v2823
    %v2826 = vadd.s32 %v2822, 1
    %v2827 = vmul.u32 %v2826, 120
    %vm2828 = vcmp.lt.s32.totalorder %v1796, %v2827
    %vm2829 = vcmp.lt.s32.totalorder %v2820, %v2827
    %vm2830 = vmand %vm2824, %vm2828
    %vm2831 = vmand %vm2825, %vm2829
    %v2832 = vsel %vm2830, %v2819, 0.0
    %v2833 = vsel %vm2831, %v2815, 0.0
    %v2834 = vpack.c.bf16 %v2832, %v2832
    %v2835 = vpack.c.bf16 %v2833, %v2833
    %v2836 = vpack.c.bf16 %v1581, %v1580
    %v2837 = vpack.c.bf16 %v1583, %v1582
    %v2838 = vpack.c.bf16 %v1585, %v1584
    %v2839 = vpack.c.bf16 %v1587, %v1586
    %v2840 = vpack.c.bf16 %v1589, %v1588
    %v2841 = vpack.c.bf16 %v1591, %v1590
    %v2842 = vpack.c.bf16 %v1593, %v1592
    %v2843 = vpack.c.bf16 %v1595, %v1594
    %v2844 = vpack.c.bf16 %v1597, %v1596
    %v2845 = vpack.c.bf16 %v1599, %v1598
    %v2846 = vpack.c.bf16 %v1601, %v1600
    %v2847 = vpack.c.bf16 %v1603, %v1602
    %v2848 = vpack.c.bf16 %v1605, %v1604
    %v2849 = vpack.c.bf16 %v1607, %v1606
    %v2850 = vpack.c.bf16 %v1609, %v1608
    %vm2851 = vcmask 916480
    %v2853 = vsel %vm2851, %v2835, 0
    %2855 = vmatprep.subr.bf16.mxu0 0
    %2856 = vmatpush1.bf16.msra.mxu0 %v2836
    %2857 = vmatprep.subr.bf16.mxu0 0
    %2858 = vmatpush1.bf16.msra.mxu0 %v2837
    %2859 = vmatprep.subr.bf16.mxu0 0
    %2860 = vmatpush1.bf16.msra.mxu0 %v2838
    %2861 = vmatprep.subr.bf16.mxu0 0
    %2862 = vmatpush1.bf16.msra.mxu0 %v2839
    %2863 = vmatprep.subr.bf16.mxu0 0
    %2864 = vmatpush1.bf16.msra.mxu0 %v2840
    %2865 = vmatprep.subr.bf16.mxu0 0
    %2866 = vmatpush1.bf16.msra.mxu0 %v2841
    %2867 = vmatprep.subr.bf16.mxu0 0
    %2868 = vmatpush1.bf16.msra.mxu0 %v2842
    %2869 = vmatprep.subr.bf16.mxu0 0
    %2870 = vmatpush1.bf16.msra.mxu0 %v2843
    %2871 = vmatprep.subr.bf16.mxu0 0
    %2872 = vmatpush1.bf16.msra.mxu0 %v2844
    %2873 = vmatprep.subr.bf16.mxu0 0
    %2874 = vmatpush1.bf16.msra.mxu0 %v2845
    %2875 = vmatprep.subr.bf16.mxu0 0
    %2876 = vmatpush1.bf16.msra.mxu0 %v2846
    %2877 = vmatprep.subr.bf16.mxu0 0
    %2878 = vmatpush1.bf16.msra.mxu0 %v2847
    %2879 = vmatprep.subr.bf16.mxu0 0
    %2880 = vmatpush1.bf16.msra.mxu0 %v2848
    %2881 = vmatprep.subr.bf16.mxu0 0
    %2882 = vmatpush1.bf16.msra.mxu0 %v2849
    %2883 = vmatprep.subr.bf16.mxu0 0
    %2884 = vmatpush1.bf16.msra.mxu0 %v2850
    %2885 = vmatprep.subr.bf16.mxu0 0
    %2886 = vmatpush1.bf16.msra.mxu0 0
    %2887 = vmatprep.mubr.bf16.mxu0 %v2853
    %2888 = vmatmul.mubr.bf16.gmra.mrb[0].mxu0 %v2834
    %v2889 = vpop.f32.mrb[0].mxu0
    %v2890 = vadd.f32 0.0, %v2889
    %v2891 = vpop.f32.mrb[0].mxu0
    %v2892 = vpop.f32.mrb[0].mxu0
    %v2893 = vpop.f32.mrb[0].mxu0
    %2894 = vdwg.mxu0
    %v2895 = vld [vmem:[%s2 + $0x10] sm:$0xf]
    %v2896 = vld [vmem:[%s2 + $0x24] sm:$0xf]
    %v2897 = vld [vmem:[%s2 + $0x38] sm:$0xf]
    %v2898 = vld [vmem:[%s2 + $0x4c] sm:$0xf]
    %v2899 = vld [vmem:[%s2 + $0x60] sm:$0xf]
    %v2900 = vld [vmem:[%s2 + $0x74] sm:$0xf]
    %v2901 = vld [vmem:[%s2 + $0x88] sm:$0xf]
    %v2902 = vld [vmem:[%s2 + $0x9c] sm:$0xf]
    %v2903 = vld [vmem:[#allocation3 + $0x7] sm:$0x1]
    %v2904 = vpack.c.bf16 %v2890, %v2890
    %v2905 = vlaneseq
    %v2906 = vshrl.u32 %v2905, 7
    %v2907 = vsub.s32 0, %v2906
    %v2908 = vrot.slane %v2903, %v2907
    %v2917 = vunpack.c.l.b16 %v2895
    %v2918 = vunpack.c.l.b16 %v2896
    %v2919 = vunpack.c.l.b16 %v2897
    %v2920 = vunpack.c.l.b16 %v2898
    %v2921 = vunpack.c.l.b16 %v2899
    %v2922 = vunpack.c.l.b16 %v2900
    %v2923 = vunpack.c.l.b16 %v2901
    %v2924 = vunpack.c.l.b16 %v2902
    %v2925 = vpack.c.b16 %v2918, %v2917
    %v2926 = vpack.c.b16 %v2920, %v2919
    %v2927 = vpack.c.b16 %v2922, %v2921
    %v2928 = vpack.c.b16 %v2924, %v2923
    %v2934 = vsel %vm88, %v2904, 0
    %2936 = vmatprep.subr.bf16.mxu0 0
    %2937 = vmatpush1.bf16.msra.mxu0 %v2925
    %2938 = vmatprep.subr.bf16.mxu0 0
    %2939 = vmatpush1.bf16.msra.mxu0 %v2926
    %2940 = vmatprep.subr.bf16.mxu0 0
    %2941 = vmatpush1.bf16.msra.mxu0 %v2927
    %2942 = vmatprep.subr.bf16.mxu0 0
    %2943 = vmatpush1.bf16.msra.mxu0 %v2928
    %2944 = vmatprep.subr.bf16.mxu0 0
    %2945 = vmatpush1.bf16.msra.mxu0 0
    %2946 = vmatprep.subr.bf16.mxu0 0
    %2947 = vmatpush1.bf16.msra.mxu0 0
    %2948 = vmatprep.subr.bf16.mxu0 0
    %2949 = vmatpush1.bf16.msra.mxu0 0
    %2950 = vmatprep.subr.bf16.mxu0 0
    %2951 = vmatpush1.bf16.msra.mxu0 0
    %2952 = vmatprep.subr.bf16.mxu0 0
    %2953 = vmatpush1.bf16.msra.mxu0 0
    %2954 = vmatprep.subr.bf16.mxu0 0
    %2955 = vmatpush1.bf16.msra.mxu0 0
    %2956 = vmatprep.subr.bf16.mxu0 0
    %2957 = vmatpush1.bf16.msra.mxu0 0
    %2958 = vmatprep.subr.bf16.mxu0 0
    %2959 = vmatpush1.bf16.msra.mxu0 0
    %2960 = vmatprep.subr.bf16.mxu0 0
    %2961 = vmatpush1.bf16.msra.mxu0 0
    %2962 = vmatprep.subr.bf16.mxu0 0
    %2963 = vmatpush1.bf16.msra.mxu0 0
    %2964 = vmatprep.subr.bf16.mxu0 0
    %2965 = vmatpush1.bf16.msra.mxu0 0
    %2966 = vmatprep.subr.bf16.mxu0 0
    %2967 = vmatpush1.bf16.msra.mxu0 0
    %2968 = vmatprep.mubr.bf16.mxu0 0
    %2969 = vmatmul.mubr.bf16.gmra.mrb[0].mxu0 %v2934
    %v2970 = vpop.f32.mrb[0].mxu0
    %v2971 = vadd.f32 %v2908, %v2970
    %v2972 = vpop.f32.mrb[0].mxu0
    %v2973 = vpop.f32.mrb[0].mxu0
    %v2974 = vpop.f32.mrb[0].mxu0
    %2975 = vdwg.mxu0
    %vm2976 = vcmask 80896
    %v2977 = vsel %vm2976, %v2971, 0.0
    %v2978 = vsel %vm2818, %v2665, 0.0
    %v2981 = vcombine.low %v2977, %v2978
    %v2983 = vunpack.c.l.s4 1983009808
    %v2984 = vunpack.c.0.s8 %v2983
    %v2985 = vlaneseq
    %v2986 = vshrl.u32 %v2985, 7
    %v2987 = vsub.s32 %v2984, %v2986
    %v2988 = vrot.slane %v2981, %v2987
    %2990 = vst [vmem:[#allocation6] sm:$0xf] %v2988
    // Predicated region
    $region22: #{tpu_custom_call.1} parent=1 // pred_check
      _
    $region23: #{tpu_custom_call.1} parent=1 // pred_check_branch
      %2992 = sbr.rel (0) target = $region25
    $region24: #{tpu_custom_call.1} parent=1 // pred_region
      %s2994 = ssub.s32 64, 64
      %2995 = vsyncadd [#allocation5], %s2994
      %s2997 = sshll.u32 [#allocation6], 4
      %s2998 = int_to_ptr.vmem [resolvable:$true] %s2997
      %3000 = dma.vmem_to_hbm [thread:$0]  %s2998, 64, %s4, [#allocation5]
    $region25: #{tpu_custom_call.1} parent=1 // pred_fallthru
      _
    // Predicated region
    $region26: #{tpu_custom_call.1} parent=1 // pred_check
      _
    $region27: #{tpu_custom_call.1} parent=1 // pred_check_branch
      %3002 = sbr.rel (0) target = $region29
    $region28: #{tpu_custom_call.1} parent=1 // pred_region
      %3003 = dma.done [#allocation5], 64
    $region29: #{tpu_custom_call.1} parent=1 // pred_fallthru
      _
    %3004 = vsyncpa [#allocation4], 1
    %3005 = vsyncpa [#allocation5], 1

</llo_original>
